<compile_context>
chip_gen: v7x
topology: tpu7x:2x2x1
jax: 0.10.0
libtpu: 0.0.40
codegen_flags: <defaults>
</compile_context>

<pallas_src>
import numpy as np
import jax
import jax.numpy as jnp
from jax.experimental import pallas as pl
from jax.experimental.pallas import tpu as pltpu


# Architectural constants of SimpleTimeGraphNet's time-conv chain.
CONV0_K, CONV0_S, CONV0_P = 10, 8, 1
POOL1_K, POOL1_S, POOL1_P = 5, 5, 0
CONV2_K, CONV2_S, CONV2_P = 3, 3, 0
POOL3_K, POOL3_S, POOL3_P = 3, 3, 1
CONV4_K = 4


# ---------- static shape helpers (PyTorch Conv1d / MaxPool1d length formula) ----------
def _out_len(lin, k, s, p):
    return (lin + 2 * p - k) // s + 1


def _conv_matrix(w_taps, lin, k, stride, pad):
    """(L_in, L_out) matrix M s.t. conv1d(x) == x @ M (zero padding folded in)."""
    lout = _out_len(lin, k, stride, pad)
    m = np.zeros((lin, lout), dtype=np.float32)
    w_np = np.asarray(w_taps, dtype=np.float32)
    for o in range(lout):
        for kk in range(k):
            idx = o * stride + kk - pad
            if 0 <= idx < lin:
                m[idx, o] = w_np[kk]
    return m, lout


def _pool_selectors_cat(lin, k, stride, pad):
    """(L_in, k*L_out) concatenated 0/1 selectors (tap-major columns).

    For x >= 0:  maxpool(x) == max_kk (x @ sel)[:, kk*L_out:(kk+1)*L_out].
    """
    lout = _out_len(lin, k, stride, pad)
    sel = np.zeros((lin, k * lout), dtype=np.float32)
    for o in range(lout):
        for kk in range(k):
            idx = o * stride + kk - pad
            if 0 <= idx < lin:
                sel[idx, kk * lout + o] = 1.0
    return sel, lout


# ------------------------------- Pallas kernel -------------------------------
def fused_time_graph_kernel(x_ref, w0_ref, sel1_ref, w2_ref, sel3_ref, w4_ref,
                            clsw_ref, clsb_ref, cb_ref, out_ref):
    f32 = jnp.float32
    bf16 = jnp.bfloat16

    tb = out_ref.shape[0]                 # batches in this tile
    n_nodes = clsw_ref.shape[0]
    assert x_ref.shape[0] == tb * n_nodes  # rows are node-major: node k -> [k*tb, (k+1)*tb)

    x = x_ref[...]                                                    # (R, T) bf16

    # layer 0: Conv1d(k=10, s=8, p=1) + bias + ReLU  (conv as one MXU matmul)
    h = jnp.dot(x, w0_ref[...], preferred_element_type=f32) + cb_ref[0]
    h = jnp.maximum(h, 0.0).astype(bf16)                              # (R, L1)

    # layer 1: MaxPool1d(k=5, s=5) + ReLU — ONE matmul against concatenated
    # 0/1 selectors, then VPU max over the 5 tap slices (inputs >= 0).
    pall = jnp.dot(h, sel1_ref[...], preferred_element_type=f32)      # (R, 5*L2)
    l2 = pall.shape[1] // POOL1_K
    p = pall[:, :l2]
    for kk in range(1, POOL1_K):
        p = jnp.maximum(p, pall[:, kk * l2:(kk + 1) * l2])
    h = jnp.maximum(p, 0.0).astype(bf16)                              # (R, L2)

    # layer 2: Conv1d(k=3, s=3) + bias + ReLU
    h = jnp.dot(h, w2_ref[...], preferred_element_type=f32) + cb_ref[1]
    h = jnp.maximum(h, 0.0).astype(bf16)                              # (R, L3)

    # layer 3: MaxPool1d(k=3, s=3, p=1) + ReLU — same fused-selector trick
    pall = jnp.dot(h, sel3_ref[...], preferred_element_type=f32)      # (R, 3*L4)
    l4 = pall.shape[1] // POOL3_K
    p = pall[:, :l4]
    for kk in range(1, POOL3_K):
        p = jnp.maximum(p, pall[:, kk * l4:(kk + 1) * l4])
    h = jnp.maximum(p, 0.0)                                           # (R, L4=4) f32

    # layer 4: Conv1d(k=4) -> length 1: lane reduction + bias + ReLU
    r = jnp.sum(h * w4_ref[...], axis=-1, keepdims=True) + cb_ref[2]
    r = jnp.maximum(r, 0.0)                                           # (R, 1) f32

    # fused classifier (Linear(n_nodes, 3)): node-major per-batch segment-sum
    # over contiguous sublane slices — pure VPU, no group matmul, no G matrix.
    logits = clsb_ref[...]                                            # (1, 3)
    for k in range(n_nodes):
        logits = logits + r[k * tb:(k + 1) * tb, :] * clsw_ref[k:k + 1, :]

    # softmax over the 3 classes (exact normalization)
    m = jnp.max(logits, axis=-1, keepdims=True)
    e = jnp.exp(logits - m)
    out_ref[...] = e / jnp.sum(e, axis=-1, keepdims=True)


# ------------------------------- wrapper / glue -------------------------------
def init_params(key, n_nodes):
    k0, k1, k2, k3, k4, k5 = jax.random.split(key, 6)
    return {
        "conv0_w": 0.1 * jax.random.normal(k0, (CONV0_K,), dtype=jnp.float32),
        "conv2_w": 0.1 * jax.random.normal(k1, (CONV2_K,), dtype=jnp.float32),
        "conv4_w": 0.1 * jax.random.normal(k2, (CONV4_K,), dtype=jnp.float32),
        "conv_b": 0.1 * jax.random.normal(k3, (3,), dtype=jnp.float32),  # b0, b2, b4
        "cls_w": 0.1 * jax.random.normal(k4, (3, n_nodes), dtype=jnp.float32),
        "cls_b": 0.1 * jax.random.normal(k5, (3,), dtype=jnp.float32),
    }


def simple_time_graph_net_forward(x, params, *, target_rows_per_tile=4096,
                                  vmem_limit_bytes=48 * 1024 * 1024):
    """Fused forward pass.

    Tuning per generation: v7x ~4096 rows / 48-56 MiB (64 MiB physical VMEM);
    v6e / v5e can raise to 8-16K rows / ~96 MiB (128 MiB physical VMEM).
    """
    bs, n_nodes, T = x.shape
    bf16 = jnp.bfloat16

    # Build conv-as-matmul / concatenated pool-selector matrices (glue, host side).
    w0_np, l1 = _conv_matrix(params["conv0_w"], T, CONV0_K, CONV0_S, CONV0_P)
    sel1_np, l2 = _pool_selectors_cat(l1, POOL1_K, POOL1_S, POOL1_P)
    w2_np, l3 = _conv_matrix(params["conv2_w"], l2, CONV2_K, CONV2_S, CONV2_P)
    sel3_np, l4 = _pool_selectors_cat(l3, POOL3_K, POOL3_S, POOL3_P)
    l5 = _out_len(l4, CONV4_K, 1, 0)
    assert l5 == 1, "choose T so that the final Conv1d produces length 1"

    w0_mat = jnp.asarray(w0_np, dtype=bf16)
    sel1cat = jnp.asarray(sel1_np, dtype=bf16)        # 0/1 -> exact in bf16
    w2_mat = jnp.asarray(w2_np, dtype=bf16)
    sel3cat = jnp.asarray(sel3_np, dtype=bf16)        # 0/1 -> exact in bf16
    w4_row = params["conv4_w"].reshape(1, l4).astype(jnp.float32)
    clsw = params["cls_w"].T.astype(jnp.float32).reshape(n_nodes, 3)
    clsb = params["cls_b"].reshape(1, 3).astype(jnp.float32)
    conv_b = params["conv_b"].astype(jnp.float32)                     # (3,) -> SMEM

    # ---- batch-tile sizing (rows = tb * n_nodes per grid step) ----
    tb_target = max(1, target_rows_per_tile // n_nodes)
    if bs <= tb_target:
        tb, bs_pad, n_tiles = bs, bs, 1
        # Give v7x's two TensorCores work when splitting keeps the tiling legal
        # (tb % 8 for the f32 output block, rows_tile % 16 for the bf16 x block).
        half = bs // 2
        if bs >= 2 and bs % 2 == 0 and half % 8 == 0 and (half * n_nodes) % 16 == 0:
            tb, n_tiles = half, 2
    else:
        tb = max(16, (tb_target // 16) * 16)   # tb%8==0 and (tb*n_nodes)%16==0
        bs_pad = ((bs + tb - 1) // tb) * tb
        n_tiles = bs_pad // tb
    rows_tile = tb * n_nodes

    x3 = x.astype(bf16)
    if bs_pad != bs:
        x3 = jnp.concatenate(
            [x3, jnp.zeros((bs_pad - bs, n_nodes, T), dtype=bf16)], axis=0)
    # Node-major reorder *within each tile* (row permutation on the non-minor
    # dims; fuses with the bf16 cast in XLA) so the classifier segment-sum uses
    # contiguous sublane slices in-kernel.
    x2d = (x3.reshape(n_tiles, tb, n_nodes, T)
              .transpose(0, 2, 1, 3)
              .reshape(bs_pad * n_nodes, T))

    resident = pl.Buffered(1)   # invariant inputs: fetch once, single-buffered

    out = pl.pallas_call(
        fused_time_graph_kernel,
        out_shape=jax.ShapeDtypeStruct((bs_pad, 3), jnp.float32),
        grid=(n_tiles,),
        in_specs=[
            pl.BlockSpec((rows_tile, T), lambda i: (i, 0)),            # x: streamed
            pl.BlockSpec((T, l1), lambda i: (0, 0),
                         pipeline_mode=resident),                      # conv0 matrix
            pl.BlockSpec((l1, POOL1_K * l2), lambda i: (0, 0),
                         pipeline_mode=resident),                      # pool1 selectors
            pl.BlockSpec((l2, l3), lambda i: (0, 0),
                         pipeline_mode=resident),                      # conv2 matrix
            pl.BlockSpec((l3, POOL3_K * l4), lambda i: (0, 0),
                         pipeline_mode=resident),                      # pool3 selectors
            pl.BlockSpec((1, l4), lambda i: (0, 0),
                         pipeline_mode=resident),                      # conv4 taps
            pl.BlockSpec((n_nodes, 3), lambda i: (0, 0),
                         pipeline_mode=resident),                      # cls_w^T
            pl.BlockSpec((1, 3), lambda i: (0, 0),
                         pipeline_mode=resident),                      # cls bias
            pl.BlockSpec((3,), lambda i: (0,),
                         memory_space=pltpu.MemorySpace.SMEM),         # conv biases b0,b2,b4
        ],
        # Output lane-width is 3 (< 128): masked store + tiny per-step DMA, but
        # the total output is a few KB so this is negligible here.
        out_specs=pl.BlockSpec((tb, 3), lambda i: (i, 0)),
        compiler_params=pltpu.CompilerParams(
            dimension_semantics=("parallel",),
            vmem_limit_bytes=vmem_limit_bytes,
        ),
    )(x2d, w0_mat, sel1cat, w2_mat, sel3cat, w4_row, clsw, clsb, conv_b)

    return out[:bs]


# ------------------------- pure NumPy reference (checking) -------------------------
def _reference_forward(x, params):
    x = np.asarray(x, np.float32)
    bs, n_nodes, T = x.shape
    rows = x.reshape(bs * n_nodes, T)

    def conv1d(a, w, b, stride, pad):
        k = len(w)
        ap = np.pad(a, ((0, 0), (pad, pad)))
        lout = (a.shape[1] + 2 * pad - k) // stride + 1
        out = np.empty((a.shape[0], lout), np.float32)
        for o in range(lout):
            out[:, o] = ap[:, o * stride:o * stride + k] @ w + b
        return out

    def maxpool1d(a, k, stride, pad):
        ap = np.pad(a, ((0, 0), (pad, pad)), constant_values=-np.inf)
        lout = (a.shape[1] + 2 * pad - k) // stride + 1
        out = np.empty((a.shape[0], lout), np.float32)
        for o in range(lout):
            out[:, o] = ap[:, o * stride:o * stride + k].max(axis=1)
        return out

    relu = lambda v: np.maximum(v, 0.0)
    w0 = np.asarray(params["conv0_w"]); w2 = np.asarray(params["conv2_w"])
    w4 = np.asarray(params["conv4_w"]); cb = np.asarray(params["conv_b"])
    h = relu(conv1d(rows, w0, cb[0], CONV0_S, CONV0_P))
    h = relu(maxpool1d(h, POOL1_K, POOL1_S, POOL1_P))
    h = relu(conv1d(h, w2, cb[1], CONV2_S, CONV2_P))
    h = relu(maxpool1d(h, POOL3_K, POOL3_S, POOL3_P))
    h = relu(conv1d(h, w4, cb[2], 1, 0))              # (rows, 1)
    feat = h.reshape(bs, n_nodes)
    logits = feat @ np.asarray(params["cls_w"]).T + np.asarray(params["cls_b"])
    e = np.exp(logits - logits.max(axis=1, keepdims=True))
    return e / e.sum(axis=1, keepdims=True)


if __name__ == "__main__":
    key = jax.random.PRNGKey(0)
    kx1, kx2, kx3, kp = jax.random.split(key, 4)

    # The module's chain needs T=1200 -> 150 -> 30 -> 10 -> 4 -> 1 so the final
    # Conv1d(k=4) emits length 1 (required by the classifier's view(-1, n_nodes)).
    n_nodes, T = 4, 1200
    params = init_params(kp, n_nodes)

    # case 1: tiny batch -> single-tile grid (full-extent blocks)
    x1 = jax.random.normal(kx1, (2, n_nodes, T), dtype=jnp.float32)
    out1 = jax.block_until_ready(simple_time_graph_net_forward(x1, params))
    assert out1.shape == (2, 3)
    assert bool(jnp.all(jnp.isfinite(out1)))
    assert bool(jnp.allclose(jnp.sum(out1, axis=1), 1.0, atol=1e-3))
    ref1 = _reference_forward(np.asarray(x1), params)
    assert np.allclose(np.asarray(out1), ref1, atol=0.05)

    # case 2: multi-tile pipelined grid with batch padding (40 -> 48, 3 tiles)
    x2 = jax.random.normal(kx2, (40, n_nodes, T), dtype=jnp.float32)
    out2 = jax.block_until_ready(
        simple_time_graph_net_forward(x2, params, target_rows_per_tile=64))
    assert out2.shape == (40, 3)
    assert bool(jnp.all(jnp.isfinite(out2)))
    ref2 = _reference_forward(np.asarray(x2), params)
    assert np.allclose(np.asarray(out2), ref2, atol=0.05)

    # case 3: single logical tile auto-split into 2 grid steps (dual-TC path)
    x3 = jax.random.normal(kx3, (16, n_nodes, T), dtype=jnp.float32)
    out3 = jax.block_until_ready(simple_time_graph_net_forward(x3, params))
    assert out3.shape == (16, 3)
    assert bool(jnp.all(jnp.isfinite(out3)))
    ref3 = _reference_forward(np.asarray(x3), params)
    assert np.allclose(np.asarray(out3), ref3, atol=0.05)

    print("KERNEL_OK")
</pallas_src>

<mosaic_0001>
module attributes {stable_mosaic.version = 11 : i64} {
  func.func @fused_time_graph_kernel(%arg0: i32, %arg1: memref<8x1200xbf16, #tpu.memory_space<vmem>>, %arg2: memref<1200x150xbf16, #tpu.memory_space<vmem>>, %arg3: memref<150x150xbf16, #tpu.memory_space<vmem>>, %arg4: memref<30x10xbf16, #tpu.memory_space<vmem>>, %arg5: memref<10x12xbf16, #tpu.memory_space<vmem>>, %arg6: memref<1x4xf32, #tpu.memory_space<vmem>>, %arg7: memref<4x3xf32, #tpu.memory_space<vmem>>, %arg8: memref<1x3xf32, #tpu.memory_space<vmem>>, %arg9: memref<3xf32, #tpu.memory_space<smem>>, %arg10: memref<2x3xf32, #tpu.memory_space<vmem>>) attributes {dimension_semantics = [#tpu.dimension_semantics<parallel>], iteration_bounds = array<i64: 1>, scalar_prefetch = 0 : i64, scratch_operands = 0 : i64, tpu.core_type = #tpu.core_type<tc>, window_params = [{transform_indices = @transform_0, window_bounds = array<i64: 8, 1200>}, {pipeline_mode = #tpu.pipeline_mode<synchronous>, transform_indices = @transform_1, window_bounds = array<i64: 1200, 150>}, {pipeline_mode = #tpu.pipeline_mode<synchronous>, transform_indices = @transform_2, window_bounds = array<i64: 150, 150>}, {pipeline_mode = #tpu.pipeline_mode<synchronous>, transform_indices = @transform_3, window_bounds = array<i64: 30, 10>}, {pipeline_mode = #tpu.pipeline_mode<synchronous>, transform_indices = @transform_4, window_bounds = array<i64: 10, 12>}, {pipeline_mode = #tpu.pipeline_mode<synchronous>, transform_indices = @transform_5, window_bounds = array<i64: 1, 4>}, {pipeline_mode = #tpu.pipeline_mode<synchronous>, transform_indices = @transform_6, window_bounds = array<i64: 4, 3>}, {pipeline_mode = #tpu.pipeline_mode<synchronous>, transform_indices = @transform_7, window_bounds = array<i64: 1, 3>}, {transform_indices = @transform_8, window_bounds = array<i64: 3>}, {transform_indices = @transform_9, window_bounds = array<i64: 2, 3>}]} {
    %c0 = arith.constant 0 : index
    %c0_0 = arith.constant 0 : index
    %0 = vector.load %arg1[%c0, %c0_0] : memref<8x1200xbf16, #tpu.memory_space<vmem>>, vector<8x1200xbf16>
    %c0_1 = arith.constant 0 : index
    %c0_2 = arith.constant 0 : index
    %1 = vector.load %arg2[%c0_1, %c0_2] : memref<1200x150xbf16, #tpu.memory_space<vmem>>, vector<1200x150xbf16>
    %cst = arith.constant dense<0.000000e+00> : vector<8x150xf32>
    %2 = tpu.matmul %0, %1, %cst {dimension_numbers = #tpu.dot_dimension_numbers<[1], [0], [0], [1], [0, 0, 1, 1], [], []>} : vector<8x1200xbf16>, vector<1200x150xbf16>, vector<8x150xf32> -> vector<8x150xf32>
    %c0_3 = arith.constant 0 : index
    %3 = memref.load %arg9[%c0_3] : memref<3xf32, #tpu.memory_space<smem>>
    %4 = vector.broadcast %3 : f32 to vector<8x150xf32>
    %5 = arith.addf %2, %4 : vector<8x150xf32>
    %cst_4 = arith.constant 0.000000e+00 : f32
    %6 = vector.broadcast %cst_4 : f32 to vector<8x150xf32>
    %7 = arith.maximumf %5, %6 : vector<8x150xf32>
    %8 = arith.truncf %7 : vector<8x150xf32> to vector<8x150xbf16>
    %c0_5 = arith.constant 0 : index
    %c0_6 = arith.constant 0 : index
    %9 = vector.load %arg3[%c0_5, %c0_6] : memref<150x150xbf16, #tpu.memory_space<vmem>>, vector<150x150xbf16>
    %cst_7 = arith.constant dense<0.000000e+00> : vector<8x150xf32>
    %10 = tpu.matmul %8, %9, %cst_7 {dimension_numbers = #tpu.dot_dimension_numbers<[1], [0], [0], [1], [0, 0, 1, 1], [], []>} : vector<8x150xbf16>, vector<150x150xbf16>, vector<8x150xf32> -> vector<8x150xf32>
    %11 = vector.extract_strided_slice %10 {offsets = [0, 0], sizes = [8, 30], strides = [1, 1]} : vector<8x150xf32> to vector<8x30xf32>
    %12 = vector.extract_strided_slice %10 {offsets = [0, 30], sizes = [8, 30], strides = [1, 1]} : vector<8x150xf32> to vector<8x30xf32>
    %13 = arith.maximumf %11, %12 : vector<8x30xf32>
    %14 = vector.extract_strided_slice %10 {offsets = [0, 60], sizes = [8, 30], strides = [1, 1]} : vector<8x150xf32> to vector<8x30xf32>
    %15 = arith.maximumf %13, %14 : vector<8x30xf32>
    %16 = vector.extract_strided_slice %10 {offsets = [0, 90], sizes = [8, 30], strides = [1, 1]} : vector<8x150xf32> to vector<8x30xf32>
    %17 = arith.maximumf %15, %16 : vector<8x30xf32>
    %18 = vector.extract_strided_slice %10 {offsets = [0, 120], sizes = [8, 30], strides = [1, 1]} : vector<8x150xf32> to vector<8x30xf32>
    %19 = arith.maximumf %17, %18 : vector<8x30xf32>
    %cst_8 = arith.constant 0.000000e+00 : f32
    %20 = vector.broadcast %cst_8 : f32 to vector<8x30xf32>
    %21 = arith.maximumf %19, %20 : vector<8x30xf32>
    %22 = arith.truncf %21 : vector<8x30xf32> to vector<8x30xbf16>
    %c0_9 = arith.constant 0 : index
    %c0_10 = arith.constant 0 : index
    %23 = vector.load %arg4[%c0_9, %c0_10] : memref<30x10xbf16, #tpu.memory_space<vmem>>, vector<30x10xbf16>
    %cst_11 = arith.constant dense<0.000000e+00> : vector<8x10xf32>
    %24 = tpu.matmul %22, %23, %cst_11 {dimension_numbers = #tpu.dot_dimension_numbers<[1], [0], [0], [1], [0, 0, 1, 1], [], []>} : vector<8x30xbf16>, vector<30x10xbf16>, vector<8x10xf32> -> vector<8x10xf32>
    %c1 = arith.constant 1 : index
    %25 = memref.load %arg9[%c1] : memref<3xf32, #tpu.memory_space<smem>>
    %26 = vector.broadcast %25 : f32 to vector<8x10xf32>
    %27 = arith.addf %24, %26 : vector<8x10xf32>
    %cst_12 = arith.constant 0.000000e+00 : f32
    %28 = vector.broadcast %cst_12 : f32 to vector<8x10xf32>
    %29 = arith.maximumf %27, %28 : vector<8x10xf32>
    %30 = arith.truncf %29 : vector<8x10xf32> to vector<8x10xbf16>
    %c0_13 = arith.constant 0 : index
    %c0_14 = arith.constant 0 : index
    %31 = vector.load %arg5[%c0_13, %c0_14] : memref<10x12xbf16, #tpu.memory_space<vmem>>, vector<10x12xbf16>
    %cst_15 = arith.constant dense<0.000000e+00> : vector<8x12xf32>
    %32 = tpu.matmul %30, %31, %cst_15 {dimension_numbers = #tpu.dot_dimension_numbers<[1], [0], [0], [1], [0, 0, 1, 1], [], []>} : vector<8x10xbf16>, vector<10x12xbf16>, vector<8x12xf32> -> vector<8x12xf32>
    %33 = vector.extract_strided_slice %32 {offsets = [0, 0], sizes = [8, 4], strides = [1, 1]} : vector<8x12xf32> to vector<8x4xf32>
    %34 = vector.extract_strided_slice %32 {offsets = [0, 4], sizes = [8, 4], strides = [1, 1]} : vector<8x12xf32> to vector<8x4xf32>
    %35 = arith.maximumf %33, %34 : vector<8x4xf32>
    %36 = vector.extract_strided_slice %32 {offsets = [0, 8], sizes = [8, 4], strides = [1, 1]} : vector<8x12xf32> to vector<8x4xf32>
    %37 = arith.maximumf %35, %36 : vector<8x4xf32>
    %cst_16 = arith.constant 0.000000e+00 : f32
    %38 = vector.broadcast %cst_16 : f32 to vector<8x4xf32>
    %39 = arith.maximumf %37, %38 : vector<8x4xf32>
    %c0_17 = arith.constant 0 : index
    %c0_18 = arith.constant 0 : index
    %40 = vector.load %arg6[%c0_17, %c0_18] : memref<1x4xf32, #tpu.memory_space<vmem>>, vector<1x4xf32>
    %41 = vector.broadcast %40 : vector<1x4xf32> to vector<8x4xf32>
    %42 = arith.mulf %39, %41 : vector<8x4xf32>
    %cst_19 = arith.constant dense<0.000000e+00> : vector<8xf32>
    %43 = vector.multi_reduction <add>, %42, %cst_19 [1] : vector<8x4xf32> to vector<8xf32>
    %44 = vector.shape_cast %43 : vector<8xf32> to vector<8x1xf32>
    %c2 = arith.constant 2 : index
    %45 = memref.load %arg9[%c2] : memref<3xf32, #tpu.memory_space<smem>>
    %46 = vector.broadcast %45 : f32 to vector<8x1xf32>
    %47 = arith.addf %44, %46 : vector<8x1xf32>
    %cst_20 = arith.constant 0.000000e+00 : f32
    %48 = vector.broadcast %cst_20 : f32 to vector<8x1xf32>
    %49 = arith.maximumf %47, %48 : vector<8x1xf32>
    %c0_21 = arith.constant 0 : index
    %c0_22 = arith.constant 0 : index
    %50 = vector.load %arg8[%c0_21, %c0_22] : memref<1x3xf32, #tpu.memory_space<vmem>>, vector<1x3xf32>
    %51 = vector.extract_strided_slice %49 {offsets = [0, 0], sizes = [2, 1], strides = [1, 1]} : vector<8x1xf32> to vector<2x1xf32>
    %c0_23 = arith.constant 0 : index
    %c0_24 = arith.constant 0 : index
    %52 = vector.load %arg7[%c0_23, %c0_24] : memref<4x3xf32, #tpu.memory_space<vmem>>, vector<1x3xf32>
    %53 = vector.broadcast %51 : vector<2x1xf32> to vector<2x3xf32>
    %54 = vector.broadcast %52 : vector<1x3xf32> to vector<2x3xf32>
    %55 = arith.mulf %53, %54 : vector<2x3xf32>
    %56 = vector.broadcast %50 : vector<1x3xf32> to vector<2x3xf32>
    %57 = arith.addf %56, %55 : vector<2x3xf32>
    %58 = vector.extract_strided_slice %49 {offsets = [2, 0], sizes = [2, 1], strides = [1, 1]} : vector<8x1xf32> to vector<2x1xf32>
    %c1_25 = arith.constant 1 : index
    %c0_26 = arith.constant 0 : index
    %59 = vector.load %arg7[%c1_25, %c0_26] : memref<4x3xf32, #tpu.memory_space<vmem>>, vector<1x3xf32>
    %60 = vector.broadcast %58 : vector<2x1xf32> to vector<2x3xf32>
    %61 = vector.broadcast %59 : vector<1x3xf32> to vector<2x3xf32>
    %62 = arith.mulf %60, %61 : vector<2x3xf32>
    %63 = arith.addf %57, %62 : vector<2x3xf32>
    %64 = vector.extract_strided_slice %49 {offsets = [4, 0], sizes = [2, 1], strides = [1, 1]} : vector<8x1xf32> to vector<2x1xf32>
    %c2_27 = arith.constant 2 : index
    %c0_28 = arith.constant 0 : index
    %65 = vector.load %arg7[%c2_27, %c0_28] : memref<4x3xf32, #tpu.memory_space<vmem>>, vector<1x3xf32>
    %66 = vector.broadcast %64 : vector<2x1xf32> to vector<2x3xf32>
    %67 = vector.broadcast %65 : vector<1x3xf32> to vector<2x3xf32>
    %68 = arith.mulf %66, %67 : vector<2x3xf32>
    %69 = arith.addf %63, %68 : vector<2x3xf32>
    %70 = vector.extract_strided_slice %49 {offsets = [6, 0], sizes = [2, 1], strides = [1, 1]} : vector<8x1xf32> to vector<2x1xf32>
    %c3 = arith.constant 3 : index
    %c0_29 = arith.constant 0 : index
    %71 = vector.load %arg7[%c3, %c0_29] : memref<4x3xf32, #tpu.memory_space<vmem>>, vector<1x3xf32>
    %72 = vector.broadcast %70 : vector<2x1xf32> to vector<2x3xf32>
    %73 = vector.broadcast %71 : vector<1x3xf32> to vector<2x3xf32>
    %74 = arith.mulf %72, %73 : vector<2x3xf32>
    %75 = arith.addf %69, %74 : vector<2x3xf32>
    %cst_30 = arith.constant dense<0xFF800000> : vector<2xf32>
    %76 = vector.multi_reduction <maximumf>, %75, %cst_30 [1] : vector<2x3xf32> to vector<2xf32>
    %77 = vector.shape_cast %76 : vector<2xf32> to vector<2x1xf32>
    %78 = vector.broadcast %77 : vector<2x1xf32> to vector<2x3xf32>
    %79 = arith.subf %75, %78 : vector<2x3xf32>
    %80 = math.exp %79 : vector<2x3xf32>
    %cst_31 = arith.constant dense<0.000000e+00> : vector<2xf32>
    %81 = vector.multi_reduction <add>, %80, %cst_31 [1] : vector<2x3xf32> to vector<2xf32>
    %82 = vector.shape_cast %81 : vector<2xf32> to vector<2x1xf32>
    %83 = vector.broadcast %82 : vector<2x1xf32> to vector<2x3xf32>
    %84 = arith.divf %80, %83 : vector<2x3xf32>
    %c0_32 = arith.constant 0 : index
    %c0_33 = arith.constant 0 : index
    %85 = vector.load %arg10[%c0_32, %c0_33] : memref<2x3xf32, #tpu.memory_space<vmem>>, vector<2x3xf32>
    tpu.vector_store %arg10[%c0_32, %c0_33], %84 {strides = array<i32>} : memref<2x3xf32, #tpu.memory_space<vmem>>, vector<2x3xf32>,
    return
  }
  func.func @transform_0(%arg0: i32) -> (i32, i32) {
    %c0_i32 = arith.constant 0 : i32
    %c0_i32_0 = arith.constant 0 : i32
    return %arg0, %c0_i32 : i32, i32
  }
  func.func @transform_1(%arg0: i32) -> (i32, i32) {
    %c0_i32 = arith.constant 0 : i32
    %c0_i32_0 = arith.constant 0 : i32
    %c0_i32_1 = arith.constant 0 : i32
    return %c0_i32, %c0_i32_0 : i32, i32
  }
  func.func @transform_2(%arg0: i32) -> (i32, i32) {
    %c0_i32 = arith.constant 0 : i32
    %c0_i32_0 = arith.constant 0 : i32
    %c0_i32_1 = arith.constant 0 : i32
    return %c0_i32, %c0_i32_0 : i32, i32
  }
  func.func @transform_3(%arg0: i32) -> (i32, i32) {
    %c0_i32 = arith.constant 0 : i32
    %c0_i32_0 = arith.constant 0 : i32
    %c0_i32_1 = arith.constant 0 : i32
    return %c0_i32, %c0_i32_0 : i32, i32
  }
  func.func @transform_4(%arg0: i32) -> (i32, i32) {
    %c0_i32 = arith.constant 0 : i32
    %c0_i32_0 = arith.constant 0 : i32
    %c0_i32_1 = arith.constant 0 : i32
    return %c0_i32, %c0_i32_0 : i32, i32
  }
  func.func @transform_5(%arg0: i32) -> (i32, i32) {
    %c0_i32 = arith.constant 0 : i32
    %c0_i32_0 = arith.constant 0 : i32
    %c0_i32_1 = arith.constant 0 : i32
    return %c0_i32, %c0_i32_0 : i32, i32
  }
  func.func @transform_6(%arg0: i32) -> (i32, i32) {
    %c0_i32 = arith.constant 0 : i32
    %c0_i32_0 = arith.constant 0 : i32
    %c0_i32_1 = arith.constant 0 : i32
    return %c0_i32, %c0_i32_0 : i32, i32
  }
  func.func @transform_7(%arg0: i32) -> (i32, i32) {
    %c0_i32 = arith.constant 0 : i32
    %c0_i32_0 = arith.constant 0 : i32
    %c0_i32_1 = arith.constant 0 : i32
    return %c0_i32, %c0_i32_0 : i32, i32
  }
  func.func @transform_8(%arg0: i32) -> i32 {
    %c0_i32 = arith.constant 0 : i32
    %c0_i32_0 = arith.constant 0 : i32
    return %c0_i32 : i32
  }
  func.func @transform_9(%arg0: i32) -> (i32, i32) {
    %c0_i32 = arith.constant 0 : i32
    %c0_i32_0 = arith.constant 0 : i32
    return %arg0, %c0_i32 : i32, i32
  }
}

</mosaic_0001>

<llo_original>
// kernel: tpu_custom_call.1
$region0: #{tpu_custom_call.1}
  #allocation0 [shape = 'u32[]', space=smem, size = 0x4, offset = 0x4, fixed_abs, tag = 'smem constant byte address 0x4 - core index']
  #allocation1 [shape = 'u32[144,128]{1,0:T(1,128)}', space=vmem, size = 0x12000, scoped, tag = 'internal scratch']
  %s0 = inlined_call_operand.vmem [shape: bf16[8,1200], index: 0, kind: input, shape index: {}]
  %s1 = inlined_call_operand.vmem [shape: bf16[1200,150], index: 1, kind: input, shape index: {}]
  %s2 = inlined_call_operand.vmem [shape: bf16[150,150], index: 2, kind: input, shape index: {}]
  %s3 = inlined_call_operand.vmem [shape: bf16[30,10], index: 3, kind: input, shape index: {}]
  %s4 = inlined_call_operand.vmem [shape: bf16[10,12], index: 4, kind: input, shape index: {}]
  %s5 = inlined_call_operand.vmem [shape: f32[1,4], index: 5, kind: input, shape index: {}]
  %s6 = inlined_call_operand.vmem [shape: f32[4,3], index: 6, kind: input, shape index: {}]
  %s7 = inlined_call_operand.vmem [shape: f32[1,3], index: 7, kind: input, shape index: {}]
  %s8 = inlined_call_operand.vmem [shape: f32[3], index: 8, kind: input, shape index: {}]
  %s9 = inlined_call_operand.hbm [shape: f32[2,3], index: 9, kind: output, shape index: {}]
  %s10 = sld [smem:[#allocation0]]
  $region50: #{tpu_custom_call.1} parent=0
    _
  %s12 = ssub.s32 1, %s10
  %s13 = scalar_select 0, %s12, %s10
  $region1: #{tpu_custom_call.1} parent=0
    #allocation2 [shape = 'u8[512]{0}', space=smem, size = 0x200, scoped, tag = 'input window, operand 8, single buffered']
    #allocation3 [shape = 's32[1]{0}', space=sflag, size = 0x4, scoped, tag = 'scoped memory for tpu_custom_call.1']
    #allocation4 [shape = 's32[1]{0}', space=sflag, size = 0x4, scoped, tag = 'scoped memory for tpu_custom_call.1']
    #allocation5 [shape = 'u8[1024]{0}', space=vmem, size = 0x400, scoped, tag = 'output window, operand 0, single buffered']
    %14 = vsyncpa [#allocation4], 0
    %15 = vsyncpa [#allocation3], 0
    // Predicated region
    $region2: #{tpu_custom_call.1} parent=1 // pred_check
      _
    $region3: #{tpu_custom_call.1} parent=1 // pred_check_branch
      %17 = sbr.rel (0) target = $region5
    $region4: #{tpu_custom_call.1} parent=1 // pred_region
      _
    $region5: #{tpu_custom_call.1} parent=1 // pred_fallthru
      _
    // Predicated region
    $region6: #{tpu_custom_call.1} parent=1 // pred_check
      _
    $region7: #{tpu_custom_call.1} parent=1 // pred_check_branch
      %19 = sbr.rel (0) target = $region9
    $region8: #{tpu_custom_call.1} parent=1 // pred_region
      _
    $region9: #{tpu_custom_call.1} parent=1 // pred_fallthru
      _
    // Predicated region
    $region10: #{tpu_custom_call.1} parent=1 // pred_check
      _
    $region11: #{tpu_custom_call.1} parent=1 // pred_check_branch
      %21 = sbr.rel (0) target = $region13
    $region12: #{tpu_custom_call.1} parent=1 // pred_region
      _
    $region13: #{tpu_custom_call.1} parent=1 // pred_fallthru
      _
    // Predicated region
    $region14: #{tpu_custom_call.1} parent=1 // pred_check
      _
    $region15: #{tpu_custom_call.1} parent=1 // pred_check_branch
      %23 = sbr.rel (0) target = $region17
    $region16: #{tpu_custom_call.1} parent=1 // pred_region
      _
    $region17: #{tpu_custom_call.1} parent=1 // pred_fallthru
      _
    // Predicated region
    $region18: #{tpu_custom_call.1} parent=1 // pred_check
      _
    $region19: #{tpu_custom_call.1} parent=1 // pred_check_branch
      %25 = sbr.rel (0) target = $region21
    $region20: #{tpu_custom_call.1} parent=1 // pred_region
      _
    $region21: #{tpu_custom_call.1} parent=1 // pred_fallthru
      _
    // Predicated region
    $region22: #{tpu_custom_call.1} parent=1 // pred_check
      _
    $region23: #{tpu_custom_call.1} parent=1 // pred_check_branch
      %27 = sbr.rel (0) target = $region25
    $region24: #{tpu_custom_call.1} parent=1 // pred_region
      _
    $region25: #{tpu_custom_call.1} parent=1 // pred_fallthru
      _
    // Predicated region
    $region26: #{tpu_custom_call.1} parent=1 // pred_check
      _
    $region27: #{tpu_custom_call.1} parent=1 // pred_check_branch
      %29 = sbr.rel (0) target = $region29
    $region28: #{tpu_custom_call.1} parent=1 // pred_region
      _
    $region29: #{tpu_custom_call.1} parent=1 // pred_fallthru
      _
    // Predicated region
    $region30: #{tpu_custom_call.1} parent=1 // pred_check
      _
    $region31: #{tpu_custom_call.1} parent=1 // pred_check_branch
      %31 = sbr.rel (0) target = $region33
    $region32: #{tpu_custom_call.1} parent=1 // pred_region
      _
    $region33: #{tpu_custom_call.1} parent=1 // pred_fallthru
      _
    // Predicated region
    $region34: #{tpu_custom_call.1} parent=1 // pred_check
      _
    $region35: #{tpu_custom_call.1} parent=1 // pred_check_branch
      %33 = sbr.rel (0) target = $region37
    $region36: #{tpu_custom_call.1} parent=1 // pred_region
      %s35 = ssub.s32 16, 16
      %36 = vsyncadd [#allocation4], %s35
      %s38 = sshll.u32 %s8, 4
      %s39 = int_to_ptr.vmem [resolvable:$true] %s38
      %41 = dma.vmem_to_smem %s39, 16, [#allocation2], [#allocation4]
    $region37: #{tpu_custom_call.1} parent=1 // pred_fallthru
      _
    // Predicated region
    $region38: #{tpu_custom_call.1} parent=1 // pred_check
      _
    $region39: #{tpu_custom_call.1} parent=1 // pred_check_branch
      %43 = sbr.rel (0) target = $region41
    $region40: #{tpu_custom_call.1} parent=1 // pred_region
      %44 = dma.done [#allocation4], 16
    $region41: #{tpu_custom_call.1} parent=1 // pred_fallthru
      _
    %45 = sfence
    %v47 = vld [vmem:[%s0] sm:$0xff]
    %v48 = vld [vmem:[%s0 + $0x8] sm:$0xff]
    %v49 = vld [vmem:[%s0 + $0x10] sm:$0xff]
    %v50 = vld [vmem:[%s0 + $0x18] sm:$0xff]
    %v51 = vld [vmem:[%s0 + $0x20] sm:$0xff]
    %v52 = vld [vmem:[%s1] sm:$0xff]
    %v53 = vld [vmem:[%s1 + $0x8] sm:$0xff]
    %v54 = vld [vmem:[%s1 + $0x10] sm:$0xff]
    %v55 = vld [vmem:[%s1 + $0x18] sm:$0xff]
    %v56 = vld [vmem:[%s1 + $0x20] sm:$0xff]
    %v57 = vld [vmem:[%s1 + $0x28] sm:$0xff]
    %v58 = vld [vmem:[%s1 + $0x30] sm:$0xff]
    %v59 = vld [vmem:[%s1 + $0x38] sm:$0xff]
    %v60 = vld [vmem:[%s1 + $0x40] sm:$0xff]
    %v61 = vld [vmem:[%s1 + $0x48] sm:$0xff]
    %v62 = vld [vmem:[%s1 + $0x50] sm:$0xff]
    %v63 = vld [vmem:[%s1 + $0x58] sm:$0xff]
    %v64 = vld [vmem:[%s1 + $0x60] sm:$0xff]
    %v65 = vld [vmem:[%s1 + $0x68] sm:$0xff]
    %v66 = vld [vmem:[%s1 + $0x70] sm:$0xff]
    %v67 = vld [vmem:[%s1 + $0x78] sm:$0xff]
    %v68 = vld [vmem:[%s1 + $0x80] sm:$0xff]
    %v69 = vld [vmem:[%s1 + $0x88] sm:$0xff]
    %v70 = vld [vmem:[%s1 + $0x90] sm:$0xff]
    %v71 = vld [vmem:[%s1 + $0x98] sm:$0xff]
    %v72 = vld [vmem:[%s1 + $0xa0] sm:$0xff]
    %v73 = vld [vmem:[%s1 + $0xa8] sm:$0xff]
    %v74 = vld [vmem:[%s1 + $0xb0] sm:$0xff]
    %v75 = vld [vmem:[%s1 + $0xb8] sm:$0xff]
    %v76 = vld [vmem:[%s1 + $0xc0] sm:$0xff]
    %v77 = vld [vmem:[%s1 + $0xc8] sm:$0xff]
    %v78 = vld [vmem:[%s1 + $0xd0] sm:$0xff]
    %v79 = vld [vmem:[%s1 + $0xd8] sm:$0xff]
    %v80 = vld [vmem:[%s1 + $0xe0] sm:$0xff]
    %v81 = vld [vmem:[%s1 + $0xe8] sm:$0xff]
    %v82 = vld [vmem:[%s1 + $0xf0] sm:$0xff]
    %v83 = vld [vmem:[%s1 + $0xf8] sm:$0xff]
    %v84 = vld [vmem:[%s1 + $0x100] sm:$0xff]
    %v85 = vld [vmem:[%s1 + $0x108] sm:$0xff]
    %v86 = vld [vmem:[%s1 + $0x110] sm:$0xff]
    %v87 = vld [vmem:[%s1 + $0x118] sm:$0xff]
    %v88 = vld [vmem:[%s1 + $0x120] sm:$0xff]
    %v89 = vld [vmem:[%s1 + $0x128] sm:$0xff]
    %v90 = vld [vmem:[%s1 + $0x130] sm:$0xff]
    %v91 = vld [vmem:[%s1 + $0x138] sm:$0xff]
    %v92 = vld [vmem:[%s1 + $0x140] sm:$0xff]
    %v93 = vld [vmem:[%s1 + $0x148] sm:$0xff]
    %v94 = vld [vmem:[%s1 + $0x150] sm:$0xff]
    %v95 = vld [vmem:[%s1 + $0x158] sm:$0xff]
    %v96 = vld [vmem:[%s1 + $0x160] sm:$0xff]
    %v97 = vld [vmem:[%s1 + $0x168] sm:$0xff]
    %v98 = vld [vmem:[%s1 + $0x170] sm:$0xff]
    %v99 = vld [vmem:[%s1 + $0x178] sm:$0xff]
    %v100 = vld [vmem:[%s1 + $0x180] sm:$0xff]
    %v101 = vld [vmem:[%s1 + $0x188] sm:$0xff]
    %v102 = vld [vmem:[%s1 + $0x190] sm:$0xff]
    %v103 = vld [vmem:[%s1 + $0x198] sm:$0xff]
    %v104 = vld [vmem:[%s1 + $0x1a0] sm:$0xff]
    %v105 = vld [vmem:[%s1 + $0x1a8] sm:$0xff]
    %v106 = vld [vmem:[%s1 + $0x1b0] sm:$0xff]
    %v107 = vld [vmem:[%s1 + $0x1b8] sm:$0xff]
    %v108 = vld [vmem:[%s1 + $0x1c0] sm:$0xff]
    %v109 = vld [vmem:[%s1 + $0x1c8] sm:$0xff]
    %v110 = vld [vmem:[%s1 + $0x1d0] sm:$0xff]
    %v111 = vld [vmem:[%s1 + $0x1d8] sm:$0xff]
    %v112 = vld [vmem:[%s1 + $0x1e0] sm:$0xff]
    %v113 = vld [vmem:[%s1 + $0x1e8] sm:$0xff]
    %v114 = vld [vmem:[%s1 + $0x1f0] sm:$0xff]
    %v115 = vld [vmem:[%s1 + $0x1f8] sm:$0xff]
    %v116 = vld [vmem:[%s1 + $0x200] sm:$0xff]
    %v117 = vld [vmem:[%s1 + $0x208] sm:$0xff]
    %v118 = vld [vmem:[%s1 + $0x210] sm:$0xff]
    %v119 = vld [vmem:[%s1 + $0x218] sm:$0xff]
    %v120 = vld [vmem:[%s1 + $0x220] sm:$0xff]
    %v121 = vld [vmem:[%s1 + $0x228] sm:$0xff]
    %v122 = vld [vmem:[%s1 + $0x230] sm:$0xff]
    %v123 = vld [vmem:[%s1 + $0x238] sm:$0xff]
    %v124 = vld [vmem:[%s1 + $0x240] sm:$0xff]
    %v125 = vld [vmem:[%s1 + $0x248] sm:$0xff]
    %v126 = vld [vmem:[%s1 + $0x250] sm:$0xff]
    %v127 = vld [vmem:[%s1 + $0x258] sm:$0xff]
    %v128 = vld [vmem:[%s1 + $0x260] sm:$0xff]
    %v129 = vld [vmem:[%s1 + $0x268] sm:$0xff]
    %v130 = vld [vmem:[%s1 + $0x270] sm:$0xff]
    %v131 = vld [vmem:[%s1 + $0x278] sm:$0xff]
    %v132 = vld [vmem:[%s1 + $0x280] sm:$0xff]
    %v133 = vld [vmem:[%s1 + $0x288] sm:$0xff]
    %v134 = vld [vmem:[%s1 + $0x290] sm:$0xff]
    %v135 = vld [vmem:[%s1 + $0x298] sm:$0xff]
    %v136 = vld [vmem:[%s1 + $0x2a0] sm:$0xff]
    %v137 = vld [vmem:[%s1 + $0x2a8] sm:$0xff]
    %v138 = vld [vmem:[%s1 + $0x2b0] sm:$0xff]
    %v139 = vld [vmem:[%s1 + $0x2b8] sm:$0xff]
    %v140 = vld [vmem:[%s1 + $0x2c0] sm:$0xff]
    %v141 = vld [vmem:[%s1 + $0x2c8] sm:$0xff]
    %v142 = vld [vmem:[%s1 + $0x2d0] sm:$0xff]
    %v143 = vld [vmem:[%s1 + $0x2d8] sm:$0xff]
    %v144 = vld [vmem:[%s1 + $0x2e0] sm:$0xff]
    %v145 = vld [vmem:[%s1 + $0x2e8] sm:$0xff]
    %v146 = vld [vmem:[%s1 + $0x2f0] sm:$0xff]
    %v147 = vld [vmem:[%s1 + $0x2f8] sm:$0xff]
    %v148 = vld [vmem:[%s1 + $0x300] sm:$0xff]
    %v149 = vld [vmem:[%s1 + $0x308] sm:$0xff]
    %v150 = vld [vmem:[%s1 + $0x310] sm:$0xff]
    %v151 = vld [vmem:[%s1 + $0x318] sm:$0xff]
    %v152 = vld [vmem:[%s1 + $0x320] sm:$0xff]
    %v153 = vld [vmem:[%s1 + $0x328] sm:$0xff]
    %v154 = vld [vmem:[%s1 + $0x330] sm:$0xff]
    %v155 = vld [vmem:[%s1 + $0x338] sm:$0xff]
    %v156 = vld [vmem:[%s1 + $0x340] sm:$0xff]
    %v157 = vld [vmem:[%s1 + $0x348] sm:$0xff]
    %v158 = vld [vmem:[%s1 + $0x350] sm:$0xff]
    %v159 = vld [vmem:[%s1 + $0x358] sm:$0xff]
    %v160 = vld [vmem:[%s1 + $0x360] sm:$0xff]
    %v161 = vld [vmem:[%s1 + $0x368] sm:$0xff]
    %v162 = vld [vmem:[%s1 + $0x370] sm:$0xff]
    %v163 = vld [vmem:[%s1 + $0x378] sm:$0xff]
    %v164 = vld [vmem:[%s1 + $0x380] sm:$0xff]
    %v165 = vld [vmem:[%s1 + $0x388] sm:$0xff]
    %v166 = vld [vmem:[%s1 + $0x390] sm:$0xff]
    %v167 = vld [vmem:[%s1 + $0x398] sm:$0xff]
    %v168 = vld [vmem:[%s1 + $0x3a0] sm:$0xff]
    %v169 = vld [vmem:[%s1 + $0x3a8] sm:$0xff]
    %v170 = vld [vmem:[%s1 + $0x3b0] sm:$0xff]
    %v171 = vld [vmem:[%s1 + $0x3b8] sm:$0xff]
    %v172 = vld [vmem:[%s1 + $0x3c0] sm:$0xff]
    %v173 = vld [vmem:[%s1 + $0x3c8] sm:$0xff]
    %v174 = vld [vmem:[%s1 + $0x3d0] sm:$0xff]
    %v175 = vld [vmem:[%s1 + $0x3d8] sm:$0xff]
    %v176 = vld [vmem:[%s1 + $0x3e0] sm:$0xff]
    %v177 = vld [vmem:[%s1 + $0x3e8] sm:$0xff]
    %v178 = vld [vmem:[%s1 + $0x3f0] sm:$0xff]
    %v179 = vld [vmem:[%s1 + $0x3f8] sm:$0xff]
    %v180 = vld [vmem:[%s1 + $0x400] sm:$0xff]
    %v181 = vld [vmem:[%s1 + $0x408] sm:$0xff]
    %v182 = vld [vmem:[%s1 + $0x410] sm:$0xff]
    %v183 = vld [vmem:[%s1 + $0x418] sm:$0xff]
    %v184 = vld [vmem:[%s1 + $0x420] sm:$0xff]
    %v185 = vld [vmem:[%s1 + $0x428] sm:$0xff]
    %v186 = vld [vmem:[%s1 + $0x430] sm:$0xff]
    %v187 = vld [vmem:[%s1 + $0x438] sm:$0xff]
    %v188 = vld [vmem:[%s1 + $0x440] sm:$0xff]
    %v189 = vld [vmem:[%s1 + $0x448] sm:$0xff]
    %v190 = vld [vmem:[%s1 + $0x450] sm:$0xff]
    %v191 = vld [vmem:[%s1 + $0x458] sm:$0xff]
    %v192 = vld [vmem:[%s1 + $0x460] sm:$0xff]
    %v193 = vld [vmem:[%s1 + $0x468] sm:$0xff]
    %v194 = vld [vmem:[%s1 + $0x470] sm:$0xff]
    %v195 = vld [vmem:[%s1 + $0x478] sm:$0xff]
    %v196 = vld [vmem:[%s1 + $0x480] sm:$0xff]
    %v197 = vld [vmem:[%s1 + $0x488] sm:$0xff]
    %v198 = vld [vmem:[%s1 + $0x490] sm:$0xff]
    %v199 = vld [vmem:[%s1 + $0x498] sm:$0xff]
    %v200 = vld [vmem:[%s1 + $0x4a0] sm:$0xff]
    %v201 = vld [vmem:[%s1 + $0x4a8] sm:$0xff]
    %s202 = sld [smem:[#allocation2]]
    %v203 = vstv %s202
    %v209 = vunpack.c.l.b16 %v47
    %v210 = vunpack.c.h.b16 %v47
    %v211 = vunpack.c.l.b16 %v48
    %v212 = vunpack.c.h.b16 %v48
    %v213 = vunpack.c.l.b16 %v49
    %v214 = vunpack.c.h.b16 %v49
    %v215 = vunpack.c.l.b16 %v50
    %v216 = vunpack.c.h.b16 %v50
    %v217 = vunpack.c.l.b16 %v51
    %v218 = vunpack.c.h.b16 %v51
    %v219 = vpack.c.b16 %v209, %v209
    %v220 = vpack.c.b16 %v210, %v210
    %v221 = vpack.c.b16 %v211, %v211
    %v222 = vpack.c.b16 %v212, %v212
    %v223 = vpack.c.b16 %v213, %v213
    %v224 = vpack.c.b16 %v214, %v214
    %v225 = vpack.c.b16 %v215, %v215
    %v226 = vpack.c.b16 %v216, %v216
    %v227 = vpack.c.b16 %v217, %v217
    %v228 = vpack.c.b16 %v218, %v218
    %v388 = vunpack.c.l.b16 %v52
    %v389 = vunpack.c.h.b16 %v52
    %v390 = vunpack.c.l.b16 %v53
    %v391 = vunpack.c.h.b16 %v53
    %v392 = vunpack.c.l.b16 %v54
    %v393 = vunpack.c.h.b16 %v54
    %v394 = vunpack.c.l.b16 %v55
    %v395 = vunpack.c.h.b16 %v55
    %v396 = vunpack.c.l.b16 %v56
    %v397 = vunpack.c.h.b16 %v56
    %v398 = vunpack.c.l.b16 %v57
    %v399 = vunpack.c.h.b16 %v57
    %v400 = vunpack.c.l.b16 %v58
    %v401 = vunpack.c.h.b16 %v58
    %v402 = vunpack.c.l.b16 %v59
    %v403 = vunpack.c.h.b16 %v59
    %v404 = vunpack.c.l.b16 %v60
    %v405 = vunpack.c.h.b16 %v60
    %v406 = vunpack.c.l.b16 %v61
    %v407 = vunpack.c.h.b16 %v61
    %v408 = vunpack.c.l.b16 %v62
    %v409 = vunpack.c.h.b16 %v62
    %v410 = vunpack.c.l.b16 %v63
    %v411 = vunpack.c.h.b16 %v63
    %v412 = vunpack.c.l.b16 %v64
    %v413 = vunpack.c.h.b16 %v64
    %v414 = vunpack.c.l.b16 %v65
    %v415 = vunpack.c.h.b16 %v65
    %v416 = vunpack.c.l.b16 %v66
    %v417 = vunpack.c.h.b16 %v66
    %v418 = vunpack.c.l.b16 %v67
    %v419 = vunpack.c.h.b16 %v67
    %v420 = vunpack.c.l.b16 %v68
    %v421 = vunpack.c.h.b16 %v68
    %v422 = vunpack.c.l.b16 %v69
    %v423 = vunpack.c.h.b16 %v69
    %v424 = vunpack.c.l.b16 %v70
    %v425 = vunpack.c.h.b16 %v70
    %v426 = vunpack.c.l.b16 %v71
    %v427 = vunpack.c.h.b16 %v71
    %v428 = vunpack.c.l.b16 %v72
    %v429 = vunpack.c.h.b16 %v72
    %v430 = vunpack.c.l.b16 %v73
    %v431 = vunpack.c.h.b16 %v73
    %v432 = vunpack.c.l.b16 %v74
    %v433 = vunpack.c.h.b16 %v74
    %v434 = vunpack.c.l.b16 %v75
    %v435 = vunpack.c.h.b16 %v75
    %v436 = vunpack.c.l.b16 %v76
    %v437 = vunpack.c.h.b16 %v76
    %v438 = vunpack.c.l.b16 %v77
    %v439 = vunpack.c.h.b16 %v77
    %v440 = vunpack.c.l.b16 %v78
    %v441 = vunpack.c.h.b16 %v78
    %v442 = vunpack.c.l.b16 %v79
    %v443 = vunpack.c.h.b16 %v79
    %v444 = vunpack.c.l.b16 %v80
    %v445 = vunpack.c.h.b16 %v80
    %v446 = vunpack.c.l.b16 %v81
    %v447 = vunpack.c.h.b16 %v81
    %v448 = vunpack.c.l.b16 %v82
    %v449 = vunpack.c.h.b16 %v82
    %v450 = vunpack.c.l.b16 %v83
    %v451 = vunpack.c.h.b16 %v83
    %v452 = vunpack.c.l.b16 %v84
    %v453 = vunpack.c.h.b16 %v84
    %v454 = vunpack.c.l.b16 %v85
    %v455 = vunpack.c.h.b16 %v85
    %v456 = vunpack.c.l.b16 %v86
    %v457 = vunpack.c.h.b16 %v86
    %v458 = vunpack.c.l.b16 %v87
    %v459 = vunpack.c.h.b16 %v87
    %v460 = vunpack.c.l.b16 %v88
    %v461 = vunpack.c.h.b16 %v88
    %v462 = vunpack.c.l.b16 %v89
    %v463 = vunpack.c.h.b16 %v89
    %v464 = vunpack.c.l.b16 %v90
    %v465 = vunpack.c.h.b16 %v90
    %v466 = vunpack.c.l.b16 %v91
    %v467 = vunpack.c.h.b16 %v91
    %v468 = vunpack.c.l.b16 %v92
    %v469 = vunpack.c.h.b16 %v92
    %v470 = vunpack.c.l.b16 %v93
    %v471 = vunpack.c.h.b16 %v93
    %v472 = vunpack.c.l.b16 %v94
    %v473 = vunpack.c.h.b16 %v94
    %v474 = vunpack.c.l.b16 %v95
    %v475 = vunpack.c.h.b16 %v95
    %v476 = vunpack.c.l.b16 %v96
    %v477 = vunpack.c.h.b16 %v96
    %v478 = vunpack.c.l.b16 %v97
    %v479 = vunpack.c.h.b16 %v97
    %v480 = vunpack.c.l.b16 %v98
    %v481 = vunpack.c.h.b16 %v98
    %v482 = vunpack.c.l.b16 %v99
    %v483 = vunpack.c.h.b16 %v99
    %v484 = vunpack.c.l.b16 %v100
    %v485 = vunpack.c.h.b16 %v100
    %v486 = vunpack.c.l.b16 %v101
    %v487 = vunpack.c.h.b16 %v101
    %v488 = vunpack.c.l.b16 %v102
    %v489 = vunpack.c.h.b16 %v102
    %v490 = vunpack.c.l.b16 %v103
    %v491 = vunpack.c.h.b16 %v103
    %v492 = vunpack.c.l.b16 %v104
    %v493 = vunpack.c.h.b16 %v104
    %v494 = vunpack.c.l.b16 %v105
    %v495 = vunpack.c.h.b16 %v105
    %v496 = vunpack.c.l.b16 %v106
    %v497 = vunpack.c.h.b16 %v106
    %v498 = vunpack.c.l.b16 %v107
    %v499 = vunpack.c.h.b16 %v107
    %v500 = vunpack.c.l.b16 %v108
    %v501 = vunpack.c.h.b16 %v108
    %v502 = vunpack.c.l.b16 %v109
    %v503 = vunpack.c.h.b16 %v109
    %v504 = vunpack.c.l.b16 %v110
    %v505 = vunpack.c.h.b16 %v110
    %v506 = vunpack.c.l.b16 %v111
    %v507 = vunpack.c.h.b16 %v111
    %v508 = vunpack.c.l.b16 %v112
    %v509 = vunpack.c.h.b16 %v112
    %v510 = vunpack.c.l.b16 %v113
    %v511 = vunpack.c.h.b16 %v113
    %v512 = vunpack.c.l.b16 %v114
    %v513 = vunpack.c.h.b16 %v114
    %v514 = vunpack.c.l.b16 %v115
    %v515 = vunpack.c.h.b16 %v115
    %v516 = vunpack.c.l.b16 %v116
    %v517 = vunpack.c.h.b16 %v116
    %v518 = vunpack.c.l.b16 %v117
    %v519 = vunpack.c.h.b16 %v117
    %v520 = vunpack.c.l.b16 %v118
    %v521 = vunpack.c.h.b16 %v118
    %v522 = vunpack.c.l.b16 %v119
    %v523 = vunpack.c.h.b16 %v119
    %v524 = vunpack.c.l.b16 %v120
    %v525 = vunpack.c.h.b16 %v120
    %v526 = vunpack.c.l.b16 %v121
    %v527 = vunpack.c.h.b16 %v121
    %v528 = vunpack.c.l.b16 %v122
    %v529 = vunpack.c.h.b16 %v122
    %v530 = vunpack.c.l.b16 %v123
    %v531 = vunpack.c.h.b16 %v123
    %v532 = vunpack.c.l.b16 %v124
    %v533 = vunpack.c.h.b16 %v124
    %v534 = vunpack.c.l.b16 %v125
    %v535 = vunpack.c.h.b16 %v125
    %v536 = vunpack.c.l.b16 %v126
    %v537 = vunpack.c.h.b16 %v126
    %v538 = vunpack.c.l.b16 %v127
    %v539 = vunpack.c.h.b16 %v127
    %v540 = vunpack.c.l.b16 %v128
    %v541 = vunpack.c.h.b16 %v128
    %v542 = vunpack.c.l.b16 %v129
    %v543 = vunpack.c.h.b16 %v129
    %v544 = vunpack.c.l.b16 %v130
    %v545 = vunpack.c.h.b16 %v130
    %v546 = vunpack.c.l.b16 %v131
    %v547 = vunpack.c.h.b16 %v131
    %v548 = vunpack.c.l.b16 %v132
    %v549 = vunpack.c.h.b16 %v132
    %v550 = vunpack.c.l.b16 %v133
    %v551 = vunpack.c.h.b16 %v133
    %v552 = vunpack.c.l.b16 %v134
    %v553 = vunpack.c.h.b16 %v134
    %v554 = vunpack.c.l.b16 %v135
    %v555 = vunpack.c.h.b16 %v135
    %v556 = vunpack.c.l.b16 %v136
    %v557 = vunpack.c.h.b16 %v136
    %v558 = vunpack.c.l.b16 %v137
    %v559 = vunpack.c.h.b16 %v137
    %v560 = vunpack.c.l.b16 %v138
    %v561 = vunpack.c.h.b16 %v138
    %v562 = vunpack.c.l.b16 %v139
    %v563 = vunpack.c.h.b16 %v139
    %v564 = vunpack.c.l.b16 %v140
    %v565 = vunpack.c.h.b16 %v140
    %v566 = vunpack.c.l.b16 %v141
    %v567 = vunpack.c.h.b16 %v141
    %v568 = vunpack.c.l.b16 %v142
    %v569 = vunpack.c.h.b16 %v142
    %v570 = vunpack.c.l.b16 %v143
    %v571 = vunpack.c.h.b16 %v143
    %v572 = vunpack.c.l.b16 %v144
    %v573 = vunpack.c.h.b16 %v144
    %v574 = vunpack.c.l.b16 %v145
    %v575 = vunpack.c.h.b16 %v145
    %v576 = vunpack.c.l.b16 %v146
    %v577 = vunpack.c.h.b16 %v146
    %v578 = vunpack.c.l.b16 %v147
    %v579 = vunpack.c.h.b16 %v147
    %v580 = vunpack.c.l.b16 %v148
    %v581 = vunpack.c.h.b16 %v148
    %v582 = vunpack.c.l.b16 %v149
    %v583 = vunpack.c.h.b16 %v149
    %v584 = vunpack.c.l.b16 %v150
    %v585 = vunpack.c.h.b16 %v150
    %v586 = vunpack.c.l.b16 %v151
    %v587 = vunpack.c.h.b16 %v151
    %v588 = vunpack.c.l.b16 %v152
    %v589 = vunpack.c.h.b16 %v152
    %v590 = vunpack.c.l.b16 %v153
    %v591 = vunpack.c.h.b16 %v153
    %v592 = vunpack.c.l.b16 %v154
    %v593 = vunpack.c.h.b16 %v154
    %v594 = vunpack.c.l.b16 %v155
    %v595 = vunpack.c.h.b16 %v155
    %v596 = vunpack.c.l.b16 %v156
    %v597 = vunpack.c.h.b16 %v156
    %v598 = vunpack.c.l.b16 %v157
    %v599 = vunpack.c.h.b16 %v157
    %v600 = vunpack.c.l.b16 %v158
    %v601 = vunpack.c.h.b16 %v158
    %v602 = vunpack.c.l.b16 %v159
    %v603 = vunpack.c.h.b16 %v159
    %v604 = vunpack.c.l.b16 %v160
    %v605 = vunpack.c.h.b16 %v160
    %v606 = vunpack.c.l.b16 %v161
    %v607 = vunpack.c.h.b16 %v161
    %v608 = vunpack.c.l.b16 %v162
    %v609 = vunpack.c.h.b16 %v162
    %v610 = vunpack.c.l.b16 %v163
    %v611 = vunpack.c.h.b16 %v163
    %v612 = vunpack.c.l.b16 %v164
    %v613 = vunpack.c.h.b16 %v164
    %v614 = vunpack.c.l.b16 %v165
    %v615 = vunpack.c.h.b16 %v165
    %v616 = vunpack.c.l.b16 %v166
    %v617 = vunpack.c.h.b16 %v166
    %v618 = vunpack.c.l.b16 %v167
    %v619 = vunpack.c.h.b16 %v167
    %v620 = vunpack.c.l.b16 %v168
    %v621 = vunpack.c.h.b16 %v168
    %v622 = vunpack.c.l.b16 %v169
    %v623 = vunpack.c.h.b16 %v169
    %v624 = vunpack.c.l.b16 %v170
    %v625 = vunpack.c.h.b16 %v170
    %v626 = vunpack.c.l.b16 %v171
    %v627 = vunpack.c.h.b16 %v171
    %v628 = vunpack.c.l.b16 %v172
    %v629 = vunpack.c.h.b16 %v172
    %v630 = vunpack.c.l.b16 %v173
    %v631 = vunpack.c.h.b16 %v173
    %v632 = vunpack.c.l.b16 %v174
    %v633 = vunpack.c.h.b16 %v174
    %v634 = vunpack.c.l.b16 %v175
    %v635 = vunpack.c.h.b16 %v175
    %v636 = vunpack.c.l.b16 %v176
    %v637 = vunpack.c.h.b16 %v176
    %v638 = vunpack.c.l.b16 %v177
    %v639 = vunpack.c.h.b16 %v177
    %v640 = vunpack.c.l.b16 %v178
    %v641 = vunpack.c.h.b16 %v178
    %v642 = vunpack.c.l.b16 %v179
    %v643 = vunpack.c.h.b16 %v179
    %v644 = vunpack.c.l.b16 %v180
    %v645 = vunpack.c.h.b16 %v180
    %v646 = vunpack.c.l.b16 %v181
    %v647 = vunpack.c.h.b16 %v181
    %v648 = vunpack.c.l.b16 %v182
    %v649 = vunpack.c.h.b16 %v182
    %v650 = vunpack.c.l.b16 %v183
    %v651 = vunpack.c.h.b16 %v183
    %v652 = vunpack.c.l.b16 %v184
    %v653 = vunpack.c.h.b16 %v184
    %v654 = vunpack.c.l.b16 %v185
    %v655 = vunpack.c.h.b16 %v185
    %v656 = vunpack.c.l.b16 %v186
    %v657 = vunpack.c.h.b16 %v186
    %v658 = vunpack.c.l.b16 %v187
    %v659 = vunpack.c.h.b16 %v187
    %v660 = vunpack.c.l.b16 %v188
    %v661 = vunpack.c.h.b16 %v188
    %v662 = vunpack.c.l.b16 %v189
    %v663 = vunpack.c.h.b16 %v189
    %v664 = vunpack.c.l.b16 %v190
    %v665 = vunpack.c.h.b16 %v190
    %v666 = vunpack.c.l.b16 %v191
    %v667 = vunpack.c.h.b16 %v191
    %v668 = vunpack.c.l.b16 %v192
    %v669 = vunpack.c.h.b16 %v192
    %v670 = vunpack.c.l.b16 %v193
    %v671 = vunpack.c.h.b16 %v193
    %v672 = vunpack.c.l.b16 %v194
    %v673 = vunpack.c.h.b16 %v194
    %v674 = vunpack.c.l.b16 %v195
    %v675 = vunpack.c.h.b16 %v195
    %v676 = vunpack.c.l.b16 %v196
    %v677 = vunpack.c.h.b16 %v196
    %v678 = vunpack.c.l.b16 %v197
    %v679 = vunpack.c.h.b16 %v197
    %v680 = vunpack.c.l.b16 %v198
    %v681 = vunpack.c.h.b16 %v198
    %v682 = vunpack.c.l.b16 %v199
    %v683 = vunpack.c.h.b16 %v199
    %v684 = vunpack.c.l.b16 %v200
    %v685 = vunpack.c.h.b16 %v200
    %v686 = vunpack.c.l.b16 %v201
    %v687 = vunpack.c.h.b16 %v201
    %v688 = vpack.c.b16 %v390, %v388
    %v689 = vpack.c.b16 %v391, %v389
    %v690 = vpack.c.b16 %v394, %v392
    %v691 = vpack.c.b16 %v395, %v393
    %v692 = vpack.c.b16 %v398, %v396
    %v693 = vpack.c.b16 %v399, %v397
    %v694 = vpack.c.b16 %v402, %v400
    %v695 = vpack.c.b16 %v403, %v401
    %v696 = vpack.c.b16 %v406, %v404
    %v697 = vpack.c.b16 %v407, %v405
    %v698 = vpack.c.b16 %v410, %v408
    %v699 = vpack.c.b16 %v411, %v409
    %v700 = vpack.c.b16 %v414, %v412
    %v701 = vpack.c.b16 %v415, %v413
    %v702 = vpack.c.b16 %v418, %v416
    %v703 = vpack.c.b16 %v419, %v417
    %v704 = vpack.c.b16 %v422, %v420
    %v705 = vpack.c.b16 %v423, %v421
    %v706 = vpack.c.b16 %v426, %v424
    %v707 = vpack.c.b16 %v427, %v425
    %v708 = vpack.c.b16 %v430, %v428
    %v709 = vpack.c.b16 %v431, %v429
    %v710 = vpack.c.b16 %v434, %v432
    %v711 = vpack.c.b16 %v435, %v433
    %v712 = vpack.c.b16 %v438, %v436
    %v713 = vpack.c.b16 %v439, %v437
    %v714 = vpack.c.b16 %v442, %v440
    %v715 = vpack.c.b16 %v443, %v441
    %v716 = vpack.c.b16 %v446, %v444
    %v717 = vpack.c.b16 %v447, %v445
    %v718 = vpack.c.b16 %v450, %v448
    %v719 = vpack.c.b16 %v451, %v449
    %v720 = vpack.c.b16 %v454, %v452
    %v721 = vpack.c.b16 %v455, %v453
    %v722 = vpack.c.b16 %v458, %v456
    %v723 = vpack.c.b16 %v459, %v457
    %v724 = vpack.c.b16 %v462, %v460
    %v725 = vpack.c.b16 %v463, %v461
    %v726 = vpack.c.b16 %v466, %v464
    %v727 = vpack.c.b16 %v467, %v465
    %v728 = vpack.c.b16 %v470, %v468
    %v729 = vpack.c.b16 %v471, %v469
    %v730 = vpack.c.b16 %v474, %v472
    %v731 = vpack.c.b16 %v475, %v473
    %v732 = vpack.c.b16 %v478, %v476
    %v733 = vpack.c.b16 %v479, %v477
    %v734 = vpack.c.b16 %v482, %v480
    %v735 = vpack.c.b16 %v483, %v481
    %v736 = vpack.c.b16 %v486, %v484
    %v737 = vpack.c.b16 %v487, %v485
    %v738 = vpack.c.b16 %v490, %v488
    %v739 = vpack.c.b16 %v491, %v489
    %v740 = vpack.c.b16 %v494, %v492
    %v741 = vpack.c.b16 %v495, %v493
    %v742 = vpack.c.b16 %v498, %v496
    %v743 = vpack.c.b16 %v499, %v497
    %v744 = vpack.c.b16 %v502, %v500
    %v745 = vpack.c.b16 %v503, %v501
    %v746 = vpack.c.b16 %v506, %v504
    %v747 = vpack.c.b16 %v507, %v505
    %v748 = vpack.c.b16 %v510, %v508
    %v749 = vpack.c.b16 %v511, %v509
    %v750 = vpack.c.b16 %v514, %v512
    %v751 = vpack.c.b16 %v515, %v513
    %v752 = vpack.c.b16 %v518, %v516
    %v753 = vpack.c.b16 %v519, %v517
    %v754 = vpack.c.b16 %v522, %v520
    %v755 = vpack.c.b16 %v523, %v521
    %v756 = vpack.c.b16 %v526, %v524
    %v757 = vpack.c.b16 %v527, %v525
    %v758 = vpack.c.b16 %v530, %v528
    %v759 = vpack.c.b16 %v531, %v529
    %v760 = vpack.c.b16 %v534, %v532
    %v761 = vpack.c.b16 %v535, %v533
    %v762 = vpack.c.b16 %v538, %v536
    %v763 = vpack.c.b16 %v539, %v537
    %v764 = vpack.c.b16 %v542, %v540
    %v765 = vpack.c.b16 %v543, %v541
    %v766 = vpack.c.b16 %v546, %v544
    %v767 = vpack.c.b16 %v547, %v545
    %v768 = vpack.c.b16 %v550, %v548
    %v769 = vpack.c.b16 %v551, %v549
    %v770 = vpack.c.b16 %v554, %v552
    %v771 = vpack.c.b16 %v555, %v553
    %v772 = vpack.c.b16 %v558, %v556
    %v773 = vpack.c.b16 %v559, %v557
    %v774 = vpack.c.b16 %v562, %v560
    %v775 = vpack.c.b16 %v563, %v561
    %v776 = vpack.c.b16 %v566, %v564
    %v777 = vpack.c.b16 %v567, %v565
    %v778 = vpack.c.b16 %v570, %v568
    %v779 = vpack.c.b16 %v571, %v569
    %v780 = vpack.c.b16 %v574, %v572
    %v781 = vpack.c.b16 %v575, %v573
    %v782 = vpack.c.b16 %v578, %v576
    %v783 = vpack.c.b16 %v579, %v577
    %v784 = vpack.c.b16 %v582, %v580
    %v785 = vpack.c.b16 %v583, %v581
    %v786 = vpack.c.b16 %v586, %v584
    %v787 = vpack.c.b16 %v587, %v585
    %v788 = vpack.c.b16 %v590, %v588
    %v789 = vpack.c.b16 %v591, %v589
    %v790 = vpack.c.b16 %v594, %v592
    %v791 = vpack.c.b16 %v595, %v593
    %v792 = vpack.c.b16 %v598, %v596
    %v793 = vpack.c.b16 %v599, %v597
    %v794 = vpack.c.b16 %v602, %v600
    %v795 = vpack.c.b16 %v603, %v601
    %v796 = vpack.c.b16 %v606, %v604
    %v797 = vpack.c.b16 %v607, %v605
    %v798 = vpack.c.b16 %v610, %v608
    %v799 = vpack.c.b16 %v611, %v609
    %v800 = vpack.c.b16 %v614, %v612
    %v801 = vpack.c.b16 %v615, %v613
    %v802 = vpack.c.b16 %v618, %v616
    %v803 = vpack.c.b16 %v619, %v617
    %v804 = vpack.c.b16 %v622, %v620
    %v805 = vpack.c.b16 %v623, %v621
    %v806 = vpack.c.b16 %v626, %v624
    %v807 = vpack.c.b16 %v627, %v625
    %v808 = vpack.c.b16 %v630, %v628
    %v809 = vpack.c.b16 %v631, %v629
    %v810 = vpack.c.b16 %v634, %v632
    %v811 = vpack.c.b16 %v635, %v633
    %v812 = vpack.c.b16 %v638, %v636
    %v813 = vpack.c.b16 %v639, %v637
    %v814 = vpack.c.b16 %v642, %v640
    %v815 = vpack.c.b16 %v643, %v641
    %v816 = vpack.c.b16 %v646, %v644
    %v817 = vpack.c.b16 %v647, %v645
    %v818 = vpack.c.b16 %v650, %v648
    %v819 = vpack.c.b16 %v651, %v649
    %v820 = vpack.c.b16 %v654, %v652
    %v821 = vpack.c.b16 %v655, %v653
    %v822 = vpack.c.b16 %v658, %v656
    %v823 = vpack.c.b16 %v659, %v657
    %v824 = vpack.c.b16 %v662, %v660
    %v825 = vpack.c.b16 %v663, %v661
    %v826 = vpack.c.b16 %v666, %v664
    %v827 = vpack.c.b16 %v667, %v665
    %v828 = vpack.c.b16 %v670, %v668
    %v829 = vpack.c.b16 %v671, %v669
    %v830 = vpack.c.b16 %v674, %v672
    %v831 = vpack.c.b16 %v675, %v673
    %v832 = vpack.c.b16 %v678, %v676
    %v833 = vpack.c.b16 %v679, %v677
    %v834 = vpack.c.b16 %v682, %v680
    %v835 = vpack.c.b16 %v683, %v681
    %v836 = vpack.c.b16 %v686, %v684
    %v837 = vpack.c.b16 %v687, %v685
    %vm988 = vcmask 392192
    %v990 = vsel %vm988, %v228, 0
    %992 = vmatprep.subr.bf16.mxu0 %v689
    %993 = vmatpush1.bf16.msra.mxu0 %v688
    %994 = vmatprep.subr.bf16.mxu0 %v691
    %995 = vmatpush1.bf16.msra.mxu0 %v690
    %996 = vmatprep.subr.bf16.mxu0 %v693
    %997 = vmatpush1.bf16.msra.mxu0 %v692
    %998 = vmatprep.subr.bf16.mxu0 %v695
    %999 = vmatpush1.bf16.msra.mxu0 %v694
    %1000 = vmatprep.subr.bf16.mxu0 %v697
    %1001 = vmatpush1.bf16.msra.mxu0 %v696
    %1002 = vmatprep.subr.bf16.mxu0 %v699
    %1003 = vmatpush1.bf16.msra.mxu0 %v698
    %1004 = vmatprep.subr.bf16.mxu0 %v701
    %1005 = vmatpush1.bf16.msra.mxu0 %v700
    %1006 = vmatprep.subr.bf16.mxu0 %v703
    %1007 = vmatpush1.bf16.msra.mxu0 %v702
    %1008 = vmatprep.subr.bf16.mxu0 %v705
    %1009 = vmatpush1.bf16.msra.mxu0 %v704
    %1010 = vmatprep.subr.bf16.mxu0 %v707
    %1011 = vmatpush1.bf16.msra.mxu0 %v706
    %1012 = vmatprep.subr.bf16.mxu0 %v709
    %1013 = vmatpush1.bf16.msra.mxu0 %v708
    %1014 = vmatprep.subr.bf16.mxu0 %v711
    %1015 = vmatpush1.bf16.msra.mxu0 %v710
    %1016 = vmatprep.subr.bf16.mxu0 %v713
    %1017 = vmatpush1.bf16.msra.mxu0 %v712
    %1018 = vmatprep.subr.bf16.mxu0 %v715
    %1019 = vmatpush1.bf16.msra.mxu0 %v714
    %1020 = vmatprep.subr.bf16.mxu0 %v717
    %1021 = vmatpush1.bf16.msra.mxu0 %v716
    %1022 = vmatprep.subr.bf16.mxu0 %v719
    %1023 = vmatpush1.bf16.msra.mxu0 %v718
    %1024 = vmatprep.mubr.bf16.mxu0 %v220
    %1025 = vmatmul.mubr.bf16.gmra.mrb[0].mxu0 %v219
    %v1026 = vpop.f32.mrb[0].mxu0
    %v1027 = vadd.f32 %v203, %v1026
    %v1028 = vpop.f32.mrb[0].mxu0
    %v1029 = vadd.f32 %v203, %v1028
    %v1030 = vpop.f32.mrb[0].mxu0
    %v1031 = vpop.f32.mrb[0].mxu0
    %1032 = vdwg.mxu0
    %1033 = vmatprep.subr.bf16.mxu0 %v721
    %1034 = vmatpush1.bf16.msra.mxu0 %v720
    %1035 = vmatprep.subr.bf16.mxu0 %v723
    %1036 = vmatpush1.bf16.msra.mxu0 %v722
    %1037 = vmatprep.subr.bf16.mxu0 %v725
    %1038 = vmatpush1.bf16.msra.mxu0 %v724
    %1039 = vmatprep.subr.bf16.mxu0 %v727
    %1040 = vmatpush1.bf16.msra.mxu0 %v726
    %1041 = vmatprep.subr.bf16.mxu0 %v729
    %1042 = vmatpush1.bf16.msra.mxu0 %v728
    %1043 = vmatprep.subr.bf16.mxu0 %v731
    %1044 = vmatpush1.bf16.msra.mxu0 %v730
    %1045 = vmatprep.subr.bf16.mxu0 %v733
    %1046 = vmatpush1.bf16.msra.mxu0 %v732
    %1047 = vmatprep.subr.bf16.mxu0 %v735
    %1048 = vmatpush1.bf16.msra.mxu0 %v734
    %1049 = vmatprep.subr.bf16.mxu0 %v737
    %1050 = vmatpush1.bf16.msra.mxu0 %v736
    %1051 = vmatprep.subr.bf16.mxu0 %v739
    %1052 = vmatpush1.bf16.msra.mxu0 %v738
    %1053 = vmatprep.subr.bf16.mxu0 %v741
    %1054 = vmatpush1.bf16.msra.mxu0 %v740
    %1055 = vmatprep.subr.bf16.mxu0 %v743
    %1056 = vmatpush1.bf16.msra.mxu0 %v742
    %1057 = vmatprep.subr.bf16.mxu0 %v745
    %1058 = vmatpush1.bf16.msra.mxu0 %v744
    %1059 = vmatprep.subr.bf16.mxu0 %v747
    %1060 = vmatpush1.bf16.msra.mxu0 %v746
    %1061 = vmatprep.subr.bf16.mxu0 %v749
    %1062 = vmatpush1.bf16.msra.mxu0 %v748
    %1063 = vmatprep.subr.bf16.mxu0 %v751
    %1064 = vmatpush1.bf16.msra.mxu0 %v750
    %1065 = vmatprep.mubr.bf16.mxu0 %v222
    %1066 = vmatmul.mubr.bf16.gmra.mrb[0].mxu0 %v221
    %v1067 = vpop.f32.mrb[0].mxu0
    %v1068 = vadd.f32 %v1027, %v1067
    %v1069 = vpop.f32.mrb[0].mxu0
    %v1070 = vadd.f32 %v1029, %v1069
    %v1071 = vpop.f32.mrb[0].mxu0
    %v1072 = vpop.f32.mrb[0].mxu0
    %1073 = vdwg.mxu0
    %1074 = vmatprep.subr.bf16.mxu0 %v753
    %1075 = vmatpush1.bf16.msra.mxu0 %v752
    %1076 = vmatprep.subr.bf16.mxu0 %v755
    %1077 = vmatpush1.bf16.msra.mxu0 %v754
    %1078 = vmatprep.subr.bf16.mxu0 %v757
    %1079 = vmatpush1.bf16.msra.mxu0 %v756
    %1080 = vmatprep.subr.bf16.mxu0 %v759
    %1081 = vmatpush1.bf16.msra.mxu0 %v758
    %1082 = vmatprep.subr.bf16.mxu0 %v761
    %1083 = vmatpush1.bf16.msra.mxu0 %v760
    %1084 = vmatprep.subr.bf16.mxu0 %v763
    %1085 = vmatpush1.bf16.msra.mxu0 %v762
    %1086 = vmatprep.subr.bf16.mxu0 %v765
    %1087 = vmatpush1.bf16.msra.mxu0 %v764
    %1088 = vmatprep.subr.bf16.mxu0 %v767
    %1089 = vmatpush1.bf16.msra.mxu0 %v766
    %1090 = vmatprep.subr.bf16.mxu0 %v769
    %1091 = vmatpush1.bf16.msra.mxu0 %v768
    %1092 = vmatprep.subr.bf16.mxu0 %v771
    %1093 = vmatpush1.bf16.msra.mxu0 %v770
    %1094 = vmatprep.subr.bf16.mxu0 %v773
    %1095 = vmatpush1.bf16.msra.mxu0 %v772
    %1096 = vmatprep.subr.bf16.mxu0 %v775
    %1097 = vmatpush1.bf16.msra.mxu0 %v774
    %1098 = vmatprep.subr.bf16.mxu0 %v777
    %1099 = vmatpush1.bf16.msra.mxu0 %v776
    %1100 = vmatprep.subr.bf16.mxu0 %v779
    %1101 = vmatpush1.bf16.msra.mxu0 %v778
    %1102 = vmatprep.subr.bf16.mxu0 %v781
    %1103 = vmatpush1.bf16.msra.mxu0 %v780
    %1104 = vmatprep.subr.bf16.mxu0 %v783
    %1105 = vmatpush1.bf16.msra.mxu0 %v782
    %1106 = vmatprep.mubr.bf16.mxu0 %v224
    %1107 = vmatmul.mubr.bf16.gmra.mrb[0].mxu0 %v223
    %v1108 = vpop.f32.mrb[0].mxu0
    %v1109 = vadd.f32 %v1068, %v1108
    %v1110 = vpop.f32.mrb[0].mxu0
    %v1111 = vadd.f32 %v1070, %v1110
    %v1112 = vpop.f32.mrb[0].mxu0
    %v1113 = vpop.f32.mrb[0].mxu0
    %1114 = vdwg.mxu0
    %1115 = vmatprep.subr.bf16.mxu0 %v785
    %1116 = vmatpush1.bf16.msra.mxu0 %v784
    %1117 = vmatprep.subr.bf16.mxu0 %v787
    %1118 = vmatpush1.bf16.msra.mxu0 %v786
    %1119 = vmatprep.subr.bf16.mxu0 %v789
    %1120 = vmatpush1.bf16.msra.mxu0 %v788
    %1121 = vmatprep.subr.bf16.mxu0 %v791
    %1122 = vmatpush1.bf16.msra.mxu0 %v790
    %1123 = vmatprep.subr.bf16.mxu0 %v793
    %1124 = vmatpush1.bf16.msra.mxu0 %v792
    %1125 = vmatprep.subr.bf16.mxu0 %v795
    %1126 = vmatpush1.bf16.msra.mxu0 %v794
    %1127 = vmatprep.subr.bf16.mxu0 %v797
    %1128 = vmatpush1.bf16.msra.mxu0 %v796
    %1129 = vmatprep.subr.bf16.mxu0 %v799
    %1130 = vmatpush1.bf16.msra.mxu0 %v798
    %1131 = vmatprep.subr.bf16.mxu0 %v801
    %1132 = vmatpush1.bf16.msra.mxu0 %v800
    %1133 = vmatprep.subr.bf16.mxu0 %v803
    %1134 = vmatpush1.bf16.msra.mxu0 %v802
    %1135 = vmatprep.subr.bf16.mxu0 %v805
    %1136 = vmatpush1.bf16.msra.mxu0 %v804
    %1137 = vmatprep.subr.bf16.mxu0 %v807
    %1138 = vmatpush1.bf16.msra.mxu0 %v806
    %1139 = vmatprep.subr.bf16.mxu0 %v809
    %1140 = vmatpush1.bf16.msra.mxu0 %v808
    %1141 = vmatprep.subr.bf16.mxu0 %v811
    %1142 = vmatpush1.bf16.msra.mxu0 %v810
    %1143 = vmatprep.subr.bf16.mxu0 %v813
    %1144 = vmatpush1.bf16.msra.mxu0 %v812
    %1145 = vmatprep.subr.bf16.mxu0 %v815
    %1146 = vmatpush1.bf16.msra.mxu0 %v814
    %1147 = vmatprep.mubr.bf16.mxu0 %v226
    %1148 = vmatmul.mubr.bf16.gmra.mrb[0].mxu0 %v225
    %v1149 = vpop.f32.mrb[0].mxu0
    %v1150 = vadd.f32 %v1109, %v1149
    %v1151 = vpop.f32.mrb[0].mxu0
    %v1152 = vadd.f32 %v1111, %v1151
    %v1153 = vpop.f32.mrb[0].mxu0
    %v1154 = vpop.f32.mrb[0].mxu0
    %1155 = vdwg.mxu0
    %1156 = vmatprep.subr.bf16.mxu0 %v817
    %1157 = vmatpush1.bf16.msra.mxu0 %v816
    %1158 = vmatprep.subr.bf16.mxu0 %v819
    %1159 = vmatpush1.bf16.msra.mxu0 %v818
    %1160 = vmatprep.subr.bf16.mxu0 %v821
    %1161 = vmatpush1.bf16.msra.mxu0 %v820
    %1162 = vmatprep.subr.bf16.mxu0 %v823
    %1163 = vmatpush1.bf16.msra.mxu0 %v822
    %1164 = vmatprep.subr.bf16.mxu0 %v825
    %1165 = vmatpush1.bf16.msra.mxu0 %v824
    %1166 = vmatprep.subr.bf16.mxu0 %v827
    %1167 = vmatpush1.bf16.msra.mxu0 %v826
    %1168 = vmatprep.subr.bf16.mxu0 %v829
    %1169 = vmatpush1.bf16.msra.mxu0 %v828
    %1170 = vmatprep.subr.bf16.mxu0 %v831
    %1171 = vmatpush1.bf16.msra.mxu0 %v830
    %1172 = vmatprep.subr.bf16.mxu0 %v833
    %1173 = vmatpush1.bf16.msra.mxu0 %v832
    %1174 = vmatprep.subr.bf16.mxu0 %v835
    %1175 = vmatpush1.bf16.msra.mxu0 %v834
    %1176 = vmatprep.subr.bf16.mxu0 %v837
    %1177 = vmatpush1.bf16.msra.mxu0 %v836
    %1178 = vmatprep.subr.bf16.mxu0 0
    %1179 = vmatpush1.bf16.msra.mxu0 0
    %1180 = vmatprep.subr.bf16.mxu0 0
    %1181 = vmatpush1.bf16.msra.mxu0 0
    %1182 = vmatprep.subr.bf16.mxu0 0
    %1183 = vmatpush1.bf16.msra.mxu0 0
    %1184 = vmatprep.subr.bf16.mxu0 0
    %1185 = vmatpush1.bf16.msra.mxu0 0
    %1186 = vmatprep.subr.bf16.mxu0 0
    %1187 = vmatpush1.bf16.msra.mxu0 0
    %1188 = vmatprep.mubr.bf16.mxu0 %v990
    %1189 = vmatmul.mubr.bf16.gmra.mrb[0].mxu0 %v227
    %v1190 = vpop.f32.mrb[0].mxu0
    %v1191 = vadd.f32 %v1150, %v1190
    %v1192 = vpop.f32.mrb[0].mxu0
    %v1193 = vadd.f32 %v1152, %v1192
    %v1194 = vpop.f32.mrb[0].mxu0
    %v1195 = vpop.f32.mrb[0].mxu0
    %1196 = vdwg.mxu0
    %v1197 = vmax.f32 %v1191, 0.0
    %v1198 = vmax.f32 %v1193, 0.0
    %v1199 = vpack.c.bf16 %v1197, %v1197
    %v1200 = vpack.c.bf16 %v1198, %v1198
    %v1201 = vld [vmem:[%s2] sm:$0xff]
    %v1202 = vld [vmem:[%s2 + $0x8] sm:$0xff]
    %v1203 = vld [vmem:[%s2 + $0x10] sm:$0xff]
    %v1204 = vld [vmem:[%s2 + $0x18] sm:$0xff]
    %v1205 = vld [vmem:[%s2 + $0x20] sm:$0xff]
    %v1206 = vld [vmem:[%s2 + $0x28] sm:$0xff]
    %v1207 = vld [vmem:[%s2 + $0x30] sm:$0xff]
    %v1208 = vld [vmem:[%s2 + $0x38] sm:$0xff]
    %v1209 = vld [vmem:[%s2 + $0x40] sm:$0xff]
    %v1210 = vld [vmem:[%s2 + $0x48] sm:$0xff]
    %v1211 = vld [vmem:[%s2 + $0x50] sm:$0xff]
    %v1212 = vld [vmem:[%s2 + $0x58] sm:$0xff]
    %v1213 = vld [vmem:[%s2 + $0x60] sm:$0xff]
    %v1214 = vld [vmem:[%s2 + $0x68] sm:$0xff]
    %v1215 = vld [vmem:[%s2 + $0x70] sm:$0xff]
    %v1216 = vld [vmem:[%s2 + $0x78] sm:$0xff]
    %v1217 = vld [vmem:[%s2 + $0x80] sm:$0xff]
    %v1218 = vld [vmem:[%s2 + $0x88] sm:$0xff]
    %v1219 = vld [vmem:[%s2 + $0x90] sm:$0x77]
    %v1239 = vunpack.c.l.b16 %v1201
    %v1240 = vunpack.c.h.b16 %v1201
    %v1241 = vunpack.c.l.b16 %v1202
    %v1242 = vunpack.c.h.b16 %v1202
    %v1243 = vunpack.c.l.b16 %v1203
    %v1244 = vunpack.c.h.b16 %v1203
    %v1245 = vunpack.c.l.b16 %v1204
    %v1246 = vunpack.c.h.b16 %v1204
    %v1247 = vunpack.c.l.b16 %v1205
    %v1248 = vunpack.c.h.b16 %v1205
    %v1249 = vunpack.c.l.b16 %v1206
    %v1250 = vunpack.c.h.b16 %v1206
    %v1251 = vunpack.c.l.b16 %v1207
    %v1252 = vunpack.c.h.b16 %v1207
    %v1253 = vunpack.c.l.b16 %v1208
    %v1254 = vunpack.c.h.b16 %v1208
    %v1255 = vunpack.c.l.b16 %v1209
    %v1256 = vunpack.c.h.b16 %v1209
    %v1257 = vunpack.c.l.b16 %v1210
    %v1258 = vunpack.c.h.b16 %v1210
    %v1259 = vunpack.c.l.b16 %v1211
    %v1260 = vunpack.c.h.b16 %v1211
    %v1261 = vunpack.c.l.b16 %v1212
    %v1262 = vunpack.c.h.b16 %v1212
    %v1263 = vunpack.c.l.b16 %v1213
    %v1264 = vunpack.c.h.b16 %v1213
    %v1265 = vunpack.c.l.b16 %v1214
    %v1266 = vunpack.c.h.b16 %v1214
    %v1267 = vunpack.c.l.b16 %v1215
    %v1268 = vunpack.c.h.b16 %v1215
    %v1269 = vunpack.c.l.b16 %v1216
    %v1270 = vunpack.c.h.b16 %v1216
    %v1271 = vunpack.c.l.b16 %v1217
    %v1272 = vunpack.c.h.b16 %v1217
    %v1273 = vunpack.c.l.b16 %v1218
    %v1274 = vunpack.c.h.b16 %v1218
    %v1275 = vunpack.c.l.b16 %v1219
    %v1276 = vunpack.c.h.b16 %v1219
    %v1277 = vpack.c.b16 %v1241, %v1239
    %v1278 = vpack.c.b16 %v1242, %v1240
    %v1279 = vpack.c.b16 %v1245, %v1243
    %v1280 = vpack.c.b16 %v1246, %v1244
    %v1281 = vpack.c.b16 %v1249, %v1247
    %v1282 = vpack.c.b16 %v1250, %v1248
    %v1283 = vpack.c.b16 %v1253, %v1251
    %v1284 = vpack.c.b16 %v1254, %v1252
    %v1285 = vpack.c.b16 %v1257, %v1255
    %v1286 = vpack.c.b16 %v1258, %v1256
    %v1287 = vpack.c.b16 %v1261, %v1259
    %v1288 = vpack.c.b16 %v1262, %v1260
    %v1289 = vpack.c.b16 %v1265, %v1263
    %v1290 = vpack.c.b16 %v1266, %v1264
    %v1291 = vpack.c.b16 %v1269, %v1267
    %v1292 = vpack.c.b16 %v1270, %v1268
    %v1293 = vpack.c.b16 %v1273, %v1271
    %v1294 = vpack.c.b16 %v1274, %v1272
    %v1295 = vpack.c.b16 %v1275, %v1275
    %v1296 = vpack.c.b16 %v1276, %v1276
    %vm1315 = vcmask 179200
    %v1317 = vsel %vm1315, %v1200, 0
    %vm1319 = vcmask 1042432
    %v1321 = vsel %vm1319, %v1295, 0
    %v1324 = vsel %vm1319, %v1296, 0
    %1326 = vmatprep.subr.bf16.mxu0 %v1278
    %1327 = vmatpush1.bf16.msra.mxu0 %v1277
    %1328 = vmatprep.subr.bf16.mxu0 %v1280
    %1329 = vmatpush1.bf16.msra.mxu0 %v1279
    %1330 = vmatprep.subr.bf16.mxu0 %v1282
    %1331 = vmatpush1.bf16.msra.mxu0 %v1281
    %1332 = vmatprep.subr.bf16.mxu0 %v1284
    %1333 = vmatpush1.bf16.msra.mxu0 %v1283
    %1334 = vmatprep.subr.bf16.mxu0 %v1286
    %1335 = vmatpush1.bf16.msra.mxu0 %v1285
    %1336 = vmatprep.subr.bf16.mxu0 %v1288
    %1337 = vmatpush1.bf16.msra.mxu0 %v1287
    %1338 = vmatprep.subr.bf16.mxu0 %v1290
    %1339 = vmatpush1.bf16.msra.mxu0 %v1289
    %1340 = vmatprep.subr.bf16.mxu0 %v1292
    %1341 = vmatpush1.bf16.msra.mxu0 %v1291
    %1342 = vmatprep.subr.bf16.mxu0 %v1294
    %1343 = vmatpush1.bf16.msra.mxu0 %v1293
    %1344 = vmatprep.subr.bf16.mxu0 %v1324
    %1345 = vmatpush1.bf16.msra.mxu0 %v1321
    %1346 = vmatprep.subr.bf16.mxu0 0
    %1347 = vmatpush1.bf16.msra.mxu0 0
    %1348 = vmatprep.subr.bf16.mxu0 0
    %1349 = vmatpush1.bf16.msra.mxu0 0
    %1350 = vmatprep.subr.bf16.mxu0 0
    %1351 = vmatpush1.bf16.msra.mxu0 0
    %1352 = vmatprep.subr.bf16.mxu0 0
    %1353 = vmatpush1.bf16.msra.mxu0 0
    %1354 = vmatprep.subr.bf16.mxu0 0
    %1355 = vmatpush1.bf16.msra.mxu0 0
    %1356 = vmatprep.subr.bf16.mxu0 0
    %1357 = vmatpush1.bf16.msra.mxu0 0
    %1358 = vmatprep.mubr.bf16.mxu0 %v1317
    %1359 = vmatmul.mubr.bf16.gmra.mrb[0].mxu0 %v1199
    %v1360 = vpop.f32.mrb[0].mxu0
    %v1361 = vadd.f32 0.0, %v1360
    %v1362 = vpop.f32.mrb[0].mxu0
    %v1363 = vadd.f32 0.0, %v1362
    %v1364 = vpop.f32.mrb[0].mxu0
    %v1365 = vpop.f32.mrb[0].mxu0
    %1366 = vdwg.mxu0
    %1368 = vrot.lane.b32.xlu0 %v1361, 98
    %v1369 = vpop.permute.xlu0 %1368
    %v1371 = vmax.f32 %v1361, %v1369
    %1372 = vrot.lane.b32.xlu0 %v1361, 68
    %v1373 = vpop.permute.xlu0 %1372
    %v1375 = vmax.f32 %v1371, %v1373
    %1376 = vrot.lane.b32.xlu0 %v1361, 38
    %v1377 = vpop.permute.xlu0 %1376
    %v1379 = vmax.f32 %v1375, %v1377
    %1381 = vrot.lane.b32.xlu0 %v1361, 8
    %v1382 = vpop.permute.xlu0 %1381
    %1383 = vrot.lane.b32.xlu0 %v1363, 8
    %v1384 = vpop.permute.xlu0 %1383
    %vm1385 = vcmask 64512
    %v1386 = vsel %vm1385, %v1382, %v1384
    %v1388 = vmax.f32 %v1379, %v1386
    %v1389 = vmax.f32 %v1388, 0.0
    %v1390 = vpack.c.bf16 %v1389, %v1389
    %v1391 = vld [vmem:[%s3] sm:$0xf]
    %v1392 = vld [vmem:[%s3 + $0x4] sm:$0xf]
    %v1393 = vld [vmem:[%s3 + $0x8] sm:$0xf]
    %v1394 = vld [vmem:[%s3 + $0xc] sm:$0x7]
    %s1395 = sld [smem:[#allocation2 + $0x1]]
    %v1396 = vstv %s1395
    %v1401 = vunpack.c.l.b16 %v1391
    %v1402 = vunpack.c.l.b16 %v1392
    %v1403 = vunpack.c.l.b16 %v1393
    %v1404 = vunpack.c.l.b16 %v1394
    %v1405 = vpack.c.b16 %v1402, %v1401
    %v1406 = vpack.c.b16 %v1404, %v1403
    %vm1408 = vcmask 244736
    %v1410 = vsel %vm1408, %v1390, 0
    %vm1412 = vcmask 1046528
    %v1414 = vsel %vm1412, %v1406, 0
    %1416 = vmatprep.subr.bf16.mxu0 0
    %1417 = vmatpush1.bf16.msra.mxu0 %v1405
    %1418 = vmatprep.subr.bf16.mxu0 0
    %1419 = vmatpush1.bf16.msra.mxu0 %v1414
    %1420 = vmatprep.subr.bf16.mxu0 0
    %1421 = vmatpush1.bf16.msra.mxu0 0
    %1422 = vmatprep.subr.bf16.mxu0 0
    %1423 = vmatpush1.bf16.msra.mxu0 0
    %1424 = vmatprep.subr.bf16.mxu0 0
    %1425 = vmatpush1.bf16.msra.mxu0 0
    %1426 = vmatprep.subr.bf16.mxu0 0
    %1427 = vmatpush1.bf16.msra.mxu0 0
    %1428 = vmatprep.subr.bf16.mxu0 0
    %1429 = vmatpush1.bf16.msra.mxu0 0
    %1430 = vmatprep.subr.bf16.mxu0 0
    %1431 = vmatpush1.bf16.msra.mxu0 0
    %1432 = vmatprep.subr.bf16.mxu0 0
    %1433 = vmatpush1.bf16.msra.mxu0 0
    %1434 = vmatprep.subr.bf16.mxu0 0
    %1435 = vmatpush1.bf16.msra.mxu0 0
    %1436 = vmatprep.subr.bf16.mxu0 0
    %1437 = vmatpush1.bf16.msra.mxu0 0
    %1438 = vmatprep.subr.bf16.mxu0 0
    %1439 = vmatpush1.bf16.msra.mxu0 0
    %1440 = vmatprep.subr.bf16.mxu0 0
    %1441 = vmatpush1.bf16.msra.mxu0 0
    %1442 = vmatprep.subr.bf16.mxu0 0
    %1443 = vmatpush1.bf16.msra.mxu0 0
    %1444 = vmatprep.subr.bf16.mxu0 0
    %1445 = vmatpush1.bf16.msra.mxu0 0
    %1446 = vmatprep.subr.bf16.mxu0 0
    %1447 = vmatpush1.bf16.msra.mxu0 0
    %1448 = vmatprep.mubr.bf16.mxu0 0
    %1449 = vmatmul.mubr.bf16.gmra.mrb[0].mxu0 %v1410
    %v1450 = vpop.f32.mrb[0].mxu0
    %v1451 = vadd.f32 %v1396, %v1450
    %v1452 = vpop.f32.mrb[0].mxu0
    %v1453 = vpop.f32.mrb[0].mxu0
    %v1454 = vpop.f32.mrb[0].mxu0
    %1455 = vdwg.mxu0
    %v1456 = vmax.f32 %v1451, 0.0
    %v1457 = vpack.c.bf16 %v1456, %v1456
    %v1458 = vld [vmem:[%s4] sm:$0xf]
    %v1459 = vld [vmem:[%s4 + $0x4] sm:$0x1]
    %v1462 = vunpack.c.l.b16 %v1458
    %v1463 = vunpack.c.l.b16 %v1459
    %v1464 = vpack.c.b16 %v1463, %v1462
    %vm1465 = vcmask 80896
    %v1467 = vsel %vm1465, %v1457, 0
    %vm1469 = vcmask 1044480
    %v1471 = vsel %vm1469, %v1464, 0
    %1473 = vmatprep.subr.bf16.mxu0 0
    %1474 = vmatpush1.bf16.msra.mxu0 %v1471
    %1475 = vmatprep.subr.bf16.mxu0 0
    %1476 = vmatpush1.bf16.msra.mxu0 0
    %1477 = vmatprep.subr.bf16.mxu0 0
    %1478 = vmatpush1.bf16.msra.mxu0 0
    %1479 = vmatprep.subr.bf16.mxu0 0
    %1480 = vmatpush1.bf16.msra.mxu0 0
    %1481 = vmatprep.subr.bf16.mxu0 0
    %1482 = vmatpush1.bf16.msra.mxu0 0
    %1483 = vmatprep.subr.bf16.mxu0 0
    %1484 = vmatpush1.bf16.msra.mxu0 0
    %1485 = vmatprep.subr.bf16.mxu0 0
    %1486 = vmatpush1.bf16.msra.mxu0 0
    %1487 = vmatprep.subr.bf16.mxu0 0
    %1488 = vmatpush1.bf16.msra.mxu0 0
    %1489 = vmatprep.subr.bf16.mxu0 0
    %1490 = vmatpush1.bf16.msra.mxu0 0
    %1491 = vmatprep.subr.bf16.mxu0 0
    %1492 = vmatpush1.bf16.msra.mxu0 0
    %1493 = vmatprep.subr.bf16.mxu0 0
    %1494 = vmatpush1.bf16.msra.mxu0 0
    %1495 = vmatprep.subr.bf16.mxu0 0
    %1496 = vmatpush1.bf16.msra.mxu0 0
    %1497 = vmatprep.subr.bf16.mxu0 0
    %1498 = vmatpush1.bf16.msra.mxu0 0
    %1499 = vmatprep.subr.bf16.mxu0 0
    %1500 = vmatpush1.bf16.msra.mxu0 0
    %1501 = vmatprep.subr.bf16.mxu0 0
    %1502 = vmatpush1.bf16.msra.mxu0 0
    %1503 = vmatprep.subr.bf16.mxu0 0
    %1504 = vmatpush1.bf16.msra.mxu0 0
    %1505 = vmatprep.mubr.bf16.mxu0 0
    %1506 = vmatmul.mubr.bf16.gmra.mrb[0].mxu0 %v1467
    %v1507 = vpop.f32.mrb[0].mxu0
    %v1508 = vadd.f32 0.0, %v1507
    %v1509 = vpop.f32.mrb[0].mxu0
    %v1510 = vpop.f32.mrb[0].mxu0
    %v1511 = vpop.f32.mrb[0].mxu0
    %1512 = vdwg.mxu0
    %1514 = vrot.lane.b32.xlu0 %v1508, 124
    %v1515 = vpop.permute.xlu0 %1514
    %v1517 = vmax.f32 %v1508, %v1515
    %1518 = vrot.lane.b32.xlu0 %v1508, 120
    %v1519 = vpop.permute.xlu0 %1518
    %v1521 = vmax.f32 %v1517, %v1519
    %v1522 = vmax.f32 %v1521, 0.0
    %v1523 = vld [vmem:[%s5] sm:$0x1]
    %v1525 = vlaneseq
    %v1526 = vshrl.u32 %v1525, 7
    %v1527 = vsub.s32 0, %v1526
    %v1528 = vrot.slane %v1523, %v1527
    %v1530 = vmul.f32 %v1522, %v1528
    %vm1531 = vcmask 31744
    %v1532 = vsel %vm1531, %v1530, 0.0
    %1533 = vadd.xlane.f32.xlu0 %v1532
    %v1534 = vpop.xlane.xlu0 %1533
    %s1535 = sld [smem:[#allocation2 + $0x2]]
    %v1536 = vstv %s1535
    %v1537 = vadd.f32 %v1534, %v1536
    %v1538 = vmax.f32 %v1537, 0.0
    %v1539 = vld [vmem:[%s7] sm:$0x1]
    %v1540 = vld [vmem:[%s6] sm:$0x1]
    %v1541 = vlaneseq
    %v1542 = vshrl.u32 %v1541, 7
    %v1543 = vsub.s32 0, %v1542
    %v1544 = vrot.slane %v1540, %v1543
    %v1545 = vmul.f32 %v1538, %v1544
    %v1547 = vlaneseq
    %v1548 = vshrl.u32 %v1547, 7
    %v1549 = vsub.s32 0, %v1548
    %v1550 = vrot.slane %v1539, %v1549
    %v1552 = vadd.f32 %v1550, %v1545
    %v1553 = vld [vmem:[%s6 + $0x1] sm:$0x1]
    %v1554 = vlaneseq
    %v1555 = vshrl.u32 %v1554, 7
    %v1556 = vsub.s32 0, %v1555
    %v1557 = vrot.slane %v1553, %v1556
    %v1558 = vmul.f32 %v1538, %v1557
    %v1560 = vrot.slane %v1558, 2
    %v1562 = vadd.f32 %v1552, %v1560
    %v1563 = vld [vmem:[%s6 + $0x2] sm:$0x1]
    %v1564 = vlaneseq
    %v1565 = vshrl.u32 %v1564, 7
    %v1566 = vsub.s32 0, %v1565
    %v1567 = vrot.slane %v1563, %v1566
    %v1568 = vmul.f32 %v1538, %v1567
    %v1570 = vrot.slane %v1568, 4
    %v1572 = vadd.f32 %v1562, %v1570
    %v1573 = vld [vmem:[%s6 + $0x3] sm:$0x1]
    %v1574 = vlaneseq
    %v1575 = vshrl.u32 %v1574, 7
    %v1576 = vsub.s32 0, %v1575
    %v1577 = vrot.slane %v1573, %v1576
    %v1578 = vmul.f32 %v1538, %v1577
    %v1580 = vrot.slane %v1578, 6
    %v1582 = vadd.f32 %v1572, %v1580
    %vm1583 = vcmask 17408
    %v1584 = vsel %vm1583, %v1582, -inf
    %1585 = vmax.xlane.f32.xlu0 %v1584
    %v1586 = vpop.xlane.xlu0 %1585
    %v1587 = vsub.f32 %v1582, %v1586
    %v1588 = vmul.f32 %v1587, 1.442695
    %v1589 = vpow.pop %v1588
    %v1590 = vsel %vm1583, %v1589, 0.0
    %1591 = vadd.xlane.f32.xlu0 %v1590
    %v1592 = vpop.xlane.xlu0 %1591
    %v1593 = vrcp.pop %v1592
    %v1594 = vmul.f32 %v1589, %v1593
    %1595 = vst.msk [vmem:[#allocation5] sm:$0x3] %vm1583, %v1594
    // Predicated region
    $region42: #{tpu_custom_call.1} parent=1 // pred_check
      _
    $region43: #{tpu_custom_call.1} parent=1 // pred_check_branch
      %1597 = sbr.rel (0) target = $region45
    $region44: #{tpu_custom_call.1} parent=1 // pred_region
      %s1599 = ssub.s32 32, 32
      %1600 = vsyncadd [#allocation3], %s1599
      %s1602 = sshll.u32 [#allocation5], 4
      %s1603 = int_to_ptr.vmem [resolvable:$true] %s1602
      %1605 = dma.vmem_to_hbm [thread:$0]  %s1603, 32, %s9, [#allocation3]
    $region45: #{tpu_custom_call.1} parent=1 // pred_fallthru
      _
    // Predicated region
    $region46: #{tpu_custom_call.1} parent=1 // pred_check
      _
    $region47: #{tpu_custom_call.1} parent=1 // pred_check_branch
      %1607 = sbr.rel (0) target = $region49
    $region48: #{tpu_custom_call.1} parent=1 // pred_region
      %1608 = dma.done [#allocation3], 32
    $region49: #{tpu_custom_call.1} parent=1 // pred_fallthru
      _
    %1609 = vsyncpa [#allocation3], 1
    %1610 = vsyncpa [#allocation4], 1

</llo_original>
